<compile_context>
chip_gen: v7x
topology: tpu7x:2x2x1
jax: 0.10.0
libtpu: 0.0.40
codegen_flags: <defaults>
</compile_context>

<pallas_src>
import numpy as np
import jax
import jax.numpy as jnp
from jax import lax
from jax.experimental import pallas as pl
from jax.experimental.pallas import tpu as pltpu


# ----------------------------------------------------------------------------
# Pallas kernel: whole LSTM + FC + log_softmax in a single invocation
# ----------------------------------------------------------------------------
def _lstm_fc_logsoftmax_kernel(
    x_ref,        # (S, B, Din)   full input sequence (time-major)
    wih_ref,      # (Din, 4H)     W_ih^T
    whh_ref,      # (H, 4H)       W_hh^T
    b_ref,        # (1, 4H)       b_ih + b_hh
    wfc_ref,      # (H, T)        W_fc^T
    bfc_ref,      # (1, T)        b_fc
    out_ref,      # (S, B, T)     log-softmax scores (time-major)
    xw_ref,       # scratch (S*B, 4H)  hoisted input projection (+bias)
    hs_ref,       # scratch (S*B, H)   all hidden states
):
    S, B, Din = x_ref.shape
    H = whh_ref.shape[0]
    T = wfc_ref.shape[1]

    # ---- (2) Input projection hoisted out of the recurrence -----------------
    # One (S*B, Din) @ (Din, 4H) matmul instead of S tiny ones; bias folded in.
    x_flat = x_ref[...].reshape(S * B, Din)            # major-dim merge (layout no-op)
    xw_ref[...] = (
        jnp.dot(x_flat, wih_ref[...], preferred_element_type=jnp.float32)
        + b_ref[...]
    )

    whh = whh_ref[...]                                  # (H, 4H), kept in vregs

    # ---- (1) Recurrence: in-kernel unrolled loop, h/c carried as values -----
    def step(s, carry):
        h, c = carry
        base = pl.multiple_of(s * B, B)                 # sublane-aligned row offset
        gates = xw_ref[pl.ds(base, B), :] + jnp.dot(
            h, whh, preferred_element_type=jnp.float32
        )                                               # (B, 4H)
        # NOTE: 32-lane gate slices are cheap at S=8 steps; kept for clarity.
        i_g = jax.nn.sigmoid(gates[:, 0 * H:1 * H])
        f_g = jax.nn.sigmoid(gates[:, 1 * H:2 * H])
        g_g = jnp.tanh(gates[:, 2 * H:3 * H])
        o_g = jax.nn.sigmoid(gates[:, 3 * H:4 * H])
        c_new = f_g * c + i_g * g_g
        h_new = o_g * jnp.tanh(c_new)
        hs_ref[pl.ds(base, B), :] = h_new               # stash h_t for the epilogue
        return (h_new, c_new)

    h0 = jnp.zeros((B, H), jnp.float32)                 # PyTorch default: zero state
    c0 = jnp.zeros((B, H), jnp.float32)
    lax.fori_loop(0, S, step, (h0, c0), unroll=True)

    # ---- (3) Batched FC + batch-axis log_softmax epilogue --------------------
    logits = (
        jnp.dot(hs_ref[...], wfc_ref[...], preferred_element_type=jnp.float32)
        + bfc_ref[...]
    )                                                   # (S*B, T)
    logits3 = logits.reshape(S, B, T)                   # major-dim split (layout no-op)
    # log_softmax over dim=0 of the (B, S, T) result == batch axis (axis=1 here).
    m = jnp.max(logits3, axis=1, keepdims=True)
    lse = m + jnp.log(jnp.sum(jnp.exp(logits3 - m), axis=1, keepdims=True))
    out_ref[...] = (logits3 - lse).astype(out_ref.dtype)   # single full-block store


# ----------------------------------------------------------------------------
# Wrapper
# ----------------------------------------------------------------------------
def network_forward(x, params):
    """x: (batch, seq, input_dim) float32, PyTorch batch_first layout."""
    B, S, Din = x.shape
    H = params["w_hh"].shape[1]          # w_hh: (4H, H)
    T = params["w_fc"].shape[0]          # w_fc: (T, H)

    # Pre-transpose weights once (glue, stays in plain JAX).
    wih_t = params["w_ih"].T                                    # (Din, 4H)
    whh_t = params["w_hh"].T                                    # (H, 4H)
    bias = (params["b_ih"] + params["b_hh"]).reshape(1, 4 * H)  # (1, 4H)
    wfc_t = params["w_fc"].T                                    # (H, T)
    bfc = params["b_fc"].reshape(1, T)                          # (1, T)

    x_tm = jnp.transpose(x, (1, 0, 2))                          # (S, B, Din)

    out_tm = pl.pallas_call(
        _lstm_fc_logsoftmax_kernel,
        out_shape=jax.ShapeDtypeStruct((S, B, T), jnp.float32),
        grid_spec=pltpu.PrefetchScalarGridSpec(
            num_scalar_prefetch=0,
            grid=(1,),                                          # single invocation
            in_specs=[
                pl.BlockSpec((S, B, Din), lambda i: (0, 0, 0)),  # full x in VMEM
                pl.BlockSpec((Din, 4 * H), lambda i: (0, 0)),    # W_ih^T
                pl.BlockSpec((H, 4 * H), lambda i: (0, 0)),      # W_hh^T
                pl.BlockSpec((1, 4 * H), lambda i: (0, 0)),      # bias
                pl.BlockSpec((H, T), lambda i: (0, 0)),          # W_fc^T
                pl.BlockSpec((1, T), lambda i: (0, 0)),          # b_fc
            ],
            out_specs=pl.BlockSpec((S, B, T), lambda i: (0, 0, 0)),
            scratch_shapes=[
                pltpu.VMEM((S * B, 4 * H), jnp.float32),   # hoisted input projection
                pltpu.VMEM((S * B, H), jnp.float32),       # all hidden states
            ],
        ),
        compiler_params=pltpu.CompilerParams(
            dimension_semantics=("arbitrary",),
        ),
    )(x_tm, wih_t, whh_t, bias, wfc_t, bfc)

    return jnp.transpose(out_tm, (1, 0, 2))        # back to (B, S, T)


# ----------------------------------------------------------------------------
# Pure-JAX reference (for correctness check)
# ----------------------------------------------------------------------------
def network_ref(x, params):
    B, S, Din = x.shape
    H = params["w_hh"].shape[1]

    wih_t = params["w_ih"].T
    whh_t = params["w_hh"].T
    bias = params["b_ih"] + params["b_hh"]

    def step(carry, x_t):
        h, c = carry
        gates = x_t @ wih_t + h @ whh_t + bias
        i_g = jax.nn.sigmoid(gates[:, 0 * H:1 * H])
        f_g = jax.nn.sigmoid(gates[:, 1 * H:2 * H])
        g_g = jnp.tanh(gates[:, 2 * H:3 * H])
        o_g = jax.nn.sigmoid(gates[:, 3 * H:4 * H])
        c = f_g * c + i_g * g_g
        h = o_g * jnp.tanh(c)
        return (h, c), h

    h0 = jnp.zeros((B, H), jnp.float32)
    c0 = jnp.zeros((B, H), jnp.float32)
    _, hs = jax.lax.scan(step, (h0, c0), jnp.transpose(x, (1, 0, 2)))
    lstm_out = jnp.transpose(hs, (1, 0, 2))                       # (B, S, H)
    logits = lstm_out @ params["w_fc"].T + params["b_fc"]         # (B, S, T)
    return jax.nn.log_softmax(logits, axis=0)                     # dim=0 == batch


# ----------------------------------------------------------------------------
# Deterministic parameter init (PyTorch-style U(-1/sqrt(H), 1/sqrt(H)))
# ----------------------------------------------------------------------------
def init_params(key, input_dim, hidden_dim, target_size):
    k = 1.0 / np.sqrt(hidden_dim)
    keys = jax.random.split(key, 6)
    u = lambda kk, shape: jax.random.uniform(kk, shape, jnp.float32, -k, k)
    return {
        "w_ih": u(keys[0], (4 * hidden_dim, input_dim)),
        "w_hh": u(keys[1], (4 * hidden_dim, hidden_dim)),
        "b_ih": u(keys[2], (4 * hidden_dim,)),
        "b_hh": u(keys[3], (4 * hidden_dim,)),
        "w_fc": u(keys[4], (target_size, hidden_dim)),
        "b_fc": u(keys[5], (target_size,)),
    }


if __name__ == "__main__":
    BATCH, SEQ, INPUT_DIM, HIDDEN_DIM, TARGET = 8, 8, 32, 32, 16

    key = jax.random.PRNGKey(0)
    k_x, k_p = jax.random.split(key)
    x = jax.random.normal(k_x, (BATCH, SEQ, INPUT_DIM), jnp.float32)
    params = init_params(k_p, INPUT_DIM, HIDDEN_DIM, TARGET)

    scores = jax.block_until_ready(network_forward(x, params))
    ref = jax.block_until_ready(network_ref(x, params))

    assert scores.shape == (BATCH, SEQ, TARGET)
    np.testing.assert_allclose(np.asarray(scores), np.asarray(ref),
                               rtol=1e-2, atol=1e-2)
    print("KERNEL_OK")
</pallas_src>

<mosaic_0001>
module attributes {stable_mosaic.version = 11 : i64} {
  func.func @_lstm_fc_logsoftmax_kernel(%arg0: i32, %arg1: memref<8x8x32xf32, #tpu.memory_space<vmem>>, %arg2: memref<32x128xf32, #tpu.memory_space<vmem>>, %arg3: memref<32x128xf32, #tpu.memory_space<vmem>>, %arg4: memref<1x128xf32, #tpu.memory_space<vmem>>, %arg5: memref<32x16xf32, #tpu.memory_space<vmem>>, %arg6: memref<1x16xf32, #tpu.memory_space<vmem>>, %arg7: memref<8x8x16xf32, #tpu.memory_space<vmem>>, %arg8: memref<64x128xf32, #tpu.memory_space<vmem>>, %arg9: memref<64x32xf32, #tpu.memory_space<vmem>>) attributes {dimension_semantics = [#tpu.dimension_semantics<arbitrary>], iteration_bounds = array<i64: 1>, scalar_prefetch = 0 : i64, scratch_operands = 2 : i64, tpu.core_type = #tpu.core_type<tc>, window_params = [{pipeline_mode = #tpu.pipeline_mode<synchronous>, transform_indices = @transform_0, window_bounds = array<i64: 8, 8, 32>}, {pipeline_mode = #tpu.pipeline_mode<synchronous>, transform_indices = @transform_1, window_bounds = array<i64: 32, 128>}, {pipeline_mode = #tpu.pipeline_mode<synchronous>, transform_indices = @transform_2, window_bounds = array<i64: 32, 128>}, {pipeline_mode = #tpu.pipeline_mode<synchronous>, transform_indices = @transform_3, window_bounds = array<i64: 1, 128>}, {pipeline_mode = #tpu.pipeline_mode<synchronous>, transform_indices = @transform_4, window_bounds = array<i64: 32, 16>}, {pipeline_mode = #tpu.pipeline_mode<synchronous>, transform_indices = @transform_5, window_bounds = array<i64: 1, 16>}, {pipeline_mode = #tpu.pipeline_mode<synchronous>, transform_indices = @transform_6, window_bounds = array<i64: 8, 8, 16>}]} {
    %c0 = arith.constant 0 : index
    %c0_0 = arith.constant 0 : index
    %c0_1 = arith.constant 0 : index
    %0 = vector.load %arg1[%c0, %c0_0, %c0_1] : memref<8x8x32xf32, #tpu.memory_space<vmem>>, vector<8x8x32xf32>
    %1 = vector.shape_cast %0 : vector<8x8x32xf32> to vector<64x32xf32>
    %c0_2 = arith.constant 0 : index
    %c0_3 = arith.constant 0 : index
    %2 = vector.load %arg2[%c0_2, %c0_3] : memref<32x128xf32, #tpu.memory_space<vmem>>, vector<32x128xf32>
    %cst = arith.constant dense<0.000000e+00> : vector<64x128xf32>
    %3 = tpu.matmul %1, %2, %cst {dimension_numbers = #tpu.dot_dimension_numbers<[1], [0], [0], [1], [0, 0, 1, 1], [], []>} : vector<64x32xf32>, vector<32x128xf32>, vector<64x128xf32> -> vector<64x128xf32>
    %c0_4 = arith.constant 0 : index
    %c0_5 = arith.constant 0 : index
    %4 = vector.load %arg4[%c0_4, %c0_5] : memref<1x128xf32, #tpu.memory_space<vmem>>, vector<1x128xf32>
    %5 = vector.broadcast %4 : vector<1x128xf32> to vector<64x128xf32>
    %6 = arith.addf %3, %5 : vector<64x128xf32>
    %c0_6 = arith.constant 0 : index
    %c0_7 = arith.constant 0 : index
    %7 = vector.load %arg8[%c0_6, %c0_7] : memref<64x128xf32, #tpu.memory_space<vmem>>, vector<64x128xf32>
    tpu.vector_store %arg8[%c0_6, %c0_7], %6 {strides = array<i32>} : memref<64x128xf32, #tpu.memory_space<vmem>>, vector<64x128xf32>,
    %c0_8 = arith.constant 0 : index
    %c0_9 = arith.constant 0 : index
    %8 = vector.load %arg3[%c0_8, %c0_9] : memref<32x128xf32, #tpu.memory_space<vmem>>, vector<32x128xf32>
    %cst_10 = arith.constant 0.000000e+00 : f32
    %9 = vector.broadcast %cst_10 : f32 to vector<8x32xf32>
    %cst_11 = arith.constant 0.000000e+00 : f32
    %10 = vector.broadcast %cst_11 : f32 to vector<8x32xf32>
    %c0_i32 = arith.constant 0 : i32
    %c8_i32 = arith.constant 8 : i32
    %11 = arith.muli %c0_i32, %c8_i32 : i32
    %12 = tpu.assume_multiple %11, 8 : i32
    %13 = arith.index_cast %12 : i32 to index
    %c0_12 = arith.constant 0 : index
    %14 = vector.load %arg8[%13, %c0_12] : memref<64x128xf32, #tpu.memory_space<vmem>>, vector<8x128xf32>
    %cst_13 = arith.constant dense<0.000000e+00> : vector<8x128xf32>
    %15 = tpu.matmul %9, %8, %cst_13 {dimension_numbers = #tpu.dot_dimension_numbers<[1], [0], [0], [1], [0, 0, 1, 1], [], []>} : vector<8x32xf32>, vector<32x128xf32>, vector<8x128xf32> -> vector<8x128xf32>
    %16 = arith.addf %14, %15 : vector<8x128xf32>
    %17 = vector.extract_strided_slice %16 {offsets = [0, 0], sizes = [8, 32], strides = [1, 1]} : vector<8x128xf32> to vector<8x32xf32>
    %18 = arith.negf %17 : vector<8x32xf32>
    %19 = math.exp %18 : vector<8x32xf32>
    %cst_14 = arith.constant 1.000000e+00 : f32
    %20 = vector.broadcast %cst_14 : f32 to vector<8x32xf32>
    %21 = arith.addf %20, %19 : vector<8x32xf32>
    %22 = arith.divf %20, %21 : vector<8x32xf32>
    %23 = vector.extract_strided_slice %16 {offsets = [0, 32], sizes = [8, 32], strides = [1, 1]} : vector<8x128xf32> to vector<8x32xf32>
    %24 = arith.negf %23 : vector<8x32xf32>
    %25 = math.exp %24 : vector<8x32xf32>
    %cst_15 = arith.constant 1.000000e+00 : f32
    %26 = vector.broadcast %cst_15 : f32 to vector<8x32xf32>
    %27 = arith.addf %26, %25 : vector<8x32xf32>
    %28 = arith.divf %26, %27 : vector<8x32xf32>
    %29 = vector.extract_strided_slice %16 {offsets = [0, 64], sizes = [8, 32], strides = [1, 1]} : vector<8x128xf32> to vector<8x32xf32>
    %30 = math.tanh %29 : vector<8x32xf32>
    %31 = vector.extract_strided_slice %16 {offsets = [0, 96], sizes = [8, 32], strides = [1, 1]} : vector<8x128xf32> to vector<8x32xf32>
    %32 = arith.negf %31 : vector<8x32xf32>
    %33 = math.exp %32 : vector<8x32xf32>
    %cst_16 = arith.constant 1.000000e+00 : f32
    %34 = vector.broadcast %cst_16 : f32 to vector<8x32xf32>
    %35 = arith.addf %34, %33 : vector<8x32xf32>
    %36 = arith.divf %34, %35 : vector<8x32xf32>
    %37 = arith.mulf %28, %10 : vector<8x32xf32>
    %38 = arith.mulf %22, %30 : vector<8x32xf32>
    %39 = arith.addf %37, %38 : vector<8x32xf32>
    %40 = math.tanh %39 : vector<8x32xf32>
    %41 = arith.mulf %36, %40 : vector<8x32xf32>
    %42 = arith.index_cast %12 : i32 to index
    %c0_17 = arith.constant 0 : index
    %43 = vector.load %arg9[%42, %c0_17] : memref<64x32xf32, #tpu.memory_space<vmem>>, vector<8x32xf32>
    tpu.vector_store %arg9[%42, %c0_17], %41 {strides = array<i32>} : memref<64x32xf32, #tpu.memory_space<vmem>>, vector<8x32xf32>,
    %c1_i32 = arith.constant 1 : i32
    %c8_i32_18 = arith.constant 8 : i32
    %44 = arith.muli %c1_i32, %c8_i32_18 : i32
    %45 = tpu.assume_multiple %44, 8 : i32
    %46 = arith.index_cast %45 : i32 to index
    %c0_19 = arith.constant 0 : index
    %47 = vector.load %arg8[%46, %c0_19] : memref<64x128xf32, #tpu.memory_space<vmem>>, vector<8x128xf32>
    %cst_20 = arith.constant dense<0.000000e+00> : vector<8x128xf32>
    %48 = tpu.matmul %41, %8, %cst_20 {dimension_numbers = #tpu.dot_dimension_numbers<[1], [0], [0], [1], [0, 0, 1, 1], [], []>} : vector<8x32xf32>, vector<32x128xf32>, vector<8x128xf32> -> vector<8x128xf32>
    %49 = arith.addf %47, %48 : vector<8x128xf32>
    %50 = vector.extract_strided_slice %49 {offsets = [0, 0], sizes = [8, 32], strides = [1, 1]} : vector<8x128xf32> to vector<8x32xf32>
    %51 = arith.negf %50 : vector<8x32xf32>
    %52 = math.exp %51 : vector<8x32xf32>
    %cst_21 = arith.constant 1.000000e+00 : f32
    %53 = vector.broadcast %cst_21 : f32 to vector<8x32xf32>
    %54 = arith.addf %53, %52 : vector<8x32xf32>
    %55 = arith.divf %53, %54 : vector<8x32xf32>
    %56 = vector.extract_strided_slice %49 {offsets = [0, 32], sizes = [8, 32], strides = [1, 1]} : vector<8x128xf32> to vector<8x32xf32>
    %57 = arith.negf %56 : vector<8x32xf32>
    %58 = math.exp %57 : vector<8x32xf32>
    %cst_22 = arith.constant 1.000000e+00 : f32
    %59 = vector.broadcast %cst_22 : f32 to vector<8x32xf32>
    %60 = arith.addf %59, %58 : vector<8x32xf32>
    %61 = arith.divf %59, %60 : vector<8x32xf32>
    %62 = vector.extract_strided_slice %49 {offsets = [0, 64], sizes = [8, 32], strides = [1, 1]} : vector<8x128xf32> to vector<8x32xf32>
    %63 = math.tanh %62 : vector<8x32xf32>
    %64 = vector.extract_strided_slice %49 {offsets = [0, 96], sizes = [8, 32], strides = [1, 1]} : vector<8x128xf32> to vector<8x32xf32>
    %65 = arith.negf %64 : vector<8x32xf32>
    %66 = math.exp %65 : vector<8x32xf32>
    %cst_23 = arith.constant 1.000000e+00 : f32
    %67 = vector.broadcast %cst_23 : f32 to vector<8x32xf32>
    %68 = arith.addf %67, %66 : vector<8x32xf32>
    %69 = arith.divf %67, %68 : vector<8x32xf32>
    %70 = arith.mulf %61, %39 : vector<8x32xf32>
    %71 = arith.mulf %55, %63 : vector<8x32xf32>
    %72 = arith.addf %70, %71 : vector<8x32xf32>
    %73 = math.tanh %72 : vector<8x32xf32>
    %74 = arith.mulf %69, %73 : vector<8x32xf32>
    %75 = arith.index_cast %45 : i32 to index
    %c0_24 = arith.constant 0 : index
    %76 = vector.load %arg9[%75, %c0_24] : memref<64x32xf32, #tpu.memory_space<vmem>>, vector<8x32xf32>
    tpu.vector_store %arg9[%75, %c0_24], %74 {strides = array<i32>} : memref<64x32xf32, #tpu.memory_space<vmem>>, vector<8x32xf32>,
    %c2_i32 = arith.constant 2 : i32
    %c8_i32_25 = arith.constant 8 : i32
    %77 = arith.muli %c2_i32, %c8_i32_25 : i32
    %78 = tpu.assume_multiple %77, 8 : i32
    %79 = arith.index_cast %78 : i32 to index
    %c0_26 = arith.constant 0 : index
    %80 = vector.load %arg8[%79, %c0_26] : memref<64x128xf32, #tpu.memory_space<vmem>>, vector<8x128xf32>
    %cst_27 = arith.constant dense<0.000000e+00> : vector<8x128xf32>
    %81 = tpu.matmul %74, %8, %cst_27 {dimension_numbers = #tpu.dot_dimension_numbers<[1], [0], [0], [1], [0, 0, 1, 1], [], []>} : vector<8x32xf32>, vector<32x128xf32>, vector<8x128xf32> -> vector<8x128xf32>
    %82 = arith.addf %80, %81 : vector<8x128xf32>
    %83 = vector.extract_strided_slice %82 {offsets = [0, 0], sizes = [8, 32], strides = [1, 1]} : vector<8x128xf32> to vector<8x32xf32>
    %84 = arith.negf %83 : vector<8x32xf32>
    %85 = math.exp %84 : vector<8x32xf32>
    %cst_28 = arith.constant 1.000000e+00 : f32
    %86 = vector.broadcast %cst_28 : f32 to vector<8x32xf32>
    %87 = arith.addf %86, %85 : vector<8x32xf32>
    %88 = arith.divf %86, %87 : vector<8x32xf32>
    %89 = vector.extract_strided_slice %82 {offsets = [0, 32], sizes = [8, 32], strides = [1, 1]} : vector<8x128xf32> to vector<8x32xf32>
    %90 = arith.negf %89 : vector<8x32xf32>
    %91 = math.exp %90 : vector<8x32xf32>
    %cst_29 = arith.constant 1.000000e+00 : f32
    %92 = vector.broadcast %cst_29 : f32 to vector<8x32xf32>
    %93 = arith.addf %92, %91 : vector<8x32xf32>
    %94 = arith.divf %92, %93 : vector<8x32xf32>
    %95 = vector.extract_strided_slice %82 {offsets = [0, 64], sizes = [8, 32], strides = [1, 1]} : vector<8x128xf32> to vector<8x32xf32>
    %96 = math.tanh %95 : vector<8x32xf32>
    %97 = vector.extract_strided_slice %82 {offsets = [0, 96], sizes = [8, 32], strides = [1, 1]} : vector<8x128xf32> to vector<8x32xf32>
    %98 = arith.negf %97 : vector<8x32xf32>
    %99 = math.exp %98 : vector<8x32xf32>
    %cst_30 = arith.constant 1.000000e+00 : f32
    %100 = vector.broadcast %cst_30 : f32 to vector<8x32xf32>
    %101 = arith.addf %100, %99 : vector<8x32xf32>
    %102 = arith.divf %100, %101 : vector<8x32xf32>
    %103 = arith.mulf %94, %72 : vector<8x32xf32>
    %104 = arith.mulf %88, %96 : vector<8x32xf32>
    %105 = arith.addf %103, %104 : vector<8x32xf32>
    %106 = math.tanh %105 : vector<8x32xf32>
    %107 = arith.mulf %102, %106 : vector<8x32xf32>
    %108 = arith.index_cast %78 : i32 to index
    %c0_31 = arith.constant 0 : index
    %109 = vector.load %arg9[%108, %c0_31] : memref<64x32xf32, #tpu.memory_space<vmem>>, vector<8x32xf32>
    tpu.vector_store %arg9[%108, %c0_31], %107 {strides = array<i32>} : memref<64x32xf32, #tpu.memory_space<vmem>>, vector<8x32xf32>,
    %c3_i32 = arith.constant 3 : i32
    %c8_i32_32 = arith.constant 8 : i32
    %110 = arith.muli %c3_i32, %c8_i32_32 : i32
    %111 = tpu.assume_multiple %110, 8 : i32
    %112 = arith.index_cast %111 : i32 to index
    %c0_33 = arith.constant 0 : index
    %113 = vector.load %arg8[%112, %c0_33] : memref<64x128xf32, #tpu.memory_space<vmem>>, vector<8x128xf32>
    %cst_34 = arith.constant dense<0.000000e+00> : vector<8x128xf32>
    %114 = tpu.matmul %107, %8, %cst_34 {dimension_numbers = #tpu.dot_dimension_numbers<[1], [0], [0], [1], [0, 0, 1, 1], [], []>} : vector<8x32xf32>, vector<32x128xf32>, vector<8x128xf32> -> vector<8x128xf32>
    %115 = arith.addf %113, %114 : vector<8x128xf32>
    %116 = vector.extract_strided_slice %115 {offsets = [0, 0], sizes = [8, 32], strides = [1, 1]} : vector<8x128xf32> to vector<8x32xf32>
    %117 = arith.negf %116 : vector<8x32xf32>
    %118 = math.exp %117 : vector<8x32xf32>
    %cst_35 = arith.constant 1.000000e+00 : f32
    %119 = vector.broadcast %cst_35 : f32 to vector<8x32xf32>
    %120 = arith.addf %119, %118 : vector<8x32xf32>
    %121 = arith.divf %119, %120 : vector<8x32xf32>
    %122 = vector.extract_strided_slice %115 {offsets = [0, 32], sizes = [8, 32], strides = [1, 1]} : vector<8x128xf32> to vector<8x32xf32>
    %123 = arith.negf %122 : vector<8x32xf32>
    %124 = math.exp %123 : vector<8x32xf32>
    %cst_36 = arith.constant 1.000000e+00 : f32
    %125 = vector.broadcast %cst_36 : f32 to vector<8x32xf32>
    %126 = arith.addf %125, %124 : vector<8x32xf32>
    %127 = arith.divf %125, %126 : vector<8x32xf32>
    %128 = vector.extract_strided_slice %115 {offsets = [0, 64], sizes = [8, 32], strides = [1, 1]} : vector<8x128xf32> to vector<8x32xf32>
    %129 = math.tanh %128 : vector<8x32xf32>
    %130 = vector.extract_strided_slice %115 {offsets = [0, 96], sizes = [8, 32], strides = [1, 1]} : vector<8x128xf32> to vector<8x32xf32>
    %131 = arith.negf %130 : vector<8x32xf32>
    %132 = math.exp %131 : vector<8x32xf32>
    %cst_37 = arith.constant 1.000000e+00 : f32
    %133 = vector.broadcast %cst_37 : f32 to vector<8x32xf32>
    %134 = arith.addf %133, %132 : vector<8x32xf32>
    %135 = arith.divf %133, %134 : vector<8x32xf32>
    %136 = arith.mulf %127, %105 : vector<8x32xf32>
    %137 = arith.mulf %121, %129 : vector<8x32xf32>
    %138 = arith.addf %136, %137 : vector<8x32xf32>
    %139 = math.tanh %138 : vector<8x32xf32>
    %140 = arith.mulf %135, %139 : vector<8x32xf32>
    %141 = arith.index_cast %111 : i32 to index
    %c0_38 = arith.constant 0 : index
    %142 = vector.load %arg9[%141, %c0_38] : memref<64x32xf32, #tpu.memory_space<vmem>>, vector<8x32xf32>
    tpu.vector_store %arg9[%141, %c0_38], %140 {strides = array<i32>} : memref<64x32xf32, #tpu.memory_space<vmem>>, vector<8x32xf32>,
    %c4_i32 = arith.constant 4 : i32
    %c8_i32_39 = arith.constant 8 : i32
    %143 = arith.muli %c4_i32, %c8_i32_39 : i32
    %144 = tpu.assume_multiple %143, 8 : i32
    %145 = arith.index_cast %144 : i32 to index
    %c0_40 = arith.constant 0 : index
    %146 = vector.load %arg8[%145, %c0_40] : memref<64x128xf32, #tpu.memory_space<vmem>>, vector<8x128xf32>
    %cst_41 = arith.constant dense<0.000000e+00> : vector<8x128xf32>
    %147 = tpu.matmul %140, %8, %cst_41 {dimension_numbers = #tpu.dot_dimension_numbers<[1], [0], [0], [1], [0, 0, 1, 1], [], []>} : vector<8x32xf32>, vector<32x128xf32>, vector<8x128xf32> -> vector<8x128xf32>
    %148 = arith.addf %146, %147 : vector<8x128xf32>
    %149 = vector.extract_strided_slice %148 {offsets = [0, 0], sizes = [8, 32], strides = [1, 1]} : vector<8x128xf32> to vector<8x32xf32>
    %150 = arith.negf %149 : vector<8x32xf32>
    %151 = math.exp %150 : vector<8x32xf32>
    %cst_42 = arith.constant 1.000000e+00 : f32
    %152 = vector.broadcast %cst_42 : f32 to vector<8x32xf32>
    %153 = arith.addf %152, %151 : vector<8x32xf32>
    %154 = arith.divf %152, %153 : vector<8x32xf32>
    %155 = vector.extract_strided_slice %148 {offsets = [0, 32], sizes = [8, 32], strides = [1, 1]} : vector<8x128xf32> to vector<8x32xf32>
    %156 = arith.negf %155 : vector<8x32xf32>
    %157 = math.exp %156 : vector<8x32xf32>
    %cst_43 = arith.constant 1.000000e+00 : f32
    %158 = vector.broadcast %cst_43 : f32 to vector<8x32xf32>
    %159 = arith.addf %158, %157 : vector<8x32xf32>
    %160 = arith.divf %158, %159 : vector<8x32xf32>
    %161 = vector.extract_strided_slice %148 {offsets = [0, 64], sizes = [8, 32], strides = [1, 1]} : vector<8x128xf32> to vector<8x32xf32>
    %162 = math.tanh %161 : vector<8x32xf32>
    %163 = vector.extract_strided_slice %148 {offsets = [0, 96], sizes = [8, 32], strides = [1, 1]} : vector<8x128xf32> to vector<8x32xf32>
    %164 = arith.negf %163 : vector<8x32xf32>
    %165 = math.exp %164 : vector<8x32xf32>
    %cst_44 = arith.constant 1.000000e+00 : f32
    %166 = vector.broadcast %cst_44 : f32 to vector<8x32xf32>
    %167 = arith.addf %166, %165 : vector<8x32xf32>
    %168 = arith.divf %166, %167 : vector<8x32xf32>
    %169 = arith.mulf %160, %138 : vector<8x32xf32>
    %170 = arith.mulf %154, %162 : vector<8x32xf32>
    %171 = arith.addf %169, %170 : vector<8x32xf32>
    %172 = math.tanh %171 : vector<8x32xf32>
    %173 = arith.mulf %168, %172 : vector<8x32xf32>
    %174 = arith.index_cast %144 : i32 to index
    %c0_45 = arith.constant 0 : index
    %175 = vector.load %arg9[%174, %c0_45] : memref<64x32xf32, #tpu.memory_space<vmem>>, vector<8x32xf32>
    tpu.vector_store %arg9[%174, %c0_45], %173 {strides = array<i32>} : memref<64x32xf32, #tpu.memory_space<vmem>>, vector<8x32xf32>,
    %c5_i32 = arith.constant 5 : i32
    %c8_i32_46 = arith.constant 8 : i32
    %176 = arith.muli %c5_i32, %c8_i32_46 : i32
    %177 = tpu.assume_multiple %176, 8 : i32
    %178 = arith.index_cast %177 : i32 to index
    %c0_47 = arith.constant 0 : index
    %179 = vector.load %arg8[%178, %c0_47] : memref<64x128xf32, #tpu.memory_space<vmem>>, vector<8x128xf32>
    %cst_48 = arith.constant dense<0.000000e+00> : vector<8x128xf32>
    %180 = tpu.matmul %173, %8, %cst_48 {dimension_numbers = #tpu.dot_dimension_numbers<[1], [0], [0], [1], [0, 0, 1, 1], [], []>} : vector<8x32xf32>, vector<32x128xf32>, vector<8x128xf32> -> vector<8x128xf32>
    %181 = arith.addf %179, %180 : vector<8x128xf32>
    %182 = vector.extract_strided_slice %181 {offsets = [0, 0], sizes = [8, 32], strides = [1, 1]} : vector<8x128xf32> to vector<8x32xf32>
    %183 = arith.negf %182 : vector<8x32xf32>
    %184 = math.exp %183 : vector<8x32xf32>
    %cst_49 = arith.constant 1.000000e+00 : f32
    %185 = vector.broadcast %cst_49 : f32 to vector<8x32xf32>
    %186 = arith.addf %185, %184 : vector<8x32xf32>
    %187 = arith.divf %185, %186 : vector<8x32xf32>
    %188 = vector.extract_strided_slice %181 {offsets = [0, 32], sizes = [8, 32], strides = [1, 1]} : vector<8x128xf32> to vector<8x32xf32>
    %189 = arith.negf %188 : vector<8x32xf32>
    %190 = math.exp %189 : vector<8x32xf32>
    %cst_50 = arith.constant 1.000000e+00 : f32
    %191 = vector.broadcast %cst_50 : f32 to vector<8x32xf32>
    %192 = arith.addf %191, %190 : vector<8x32xf32>
    %193 = arith.divf %191, %192 : vector<8x32xf32>
    %194 = vector.extract_strided_slice %181 {offsets = [0, 64], sizes = [8, 32], strides = [1, 1]} : vector<8x128xf32> to vector<8x32xf32>
    %195 = math.tanh %194 : vector<8x32xf32>
    %196 = vector.extract_strided_slice %181 {offsets = [0, 96], sizes = [8, 32], strides = [1, 1]} : vector<8x128xf32> to vector<8x32xf32>
    %197 = arith.negf %196 : vector<8x32xf32>
    %198 = math.exp %197 : vector<8x32xf32>
    %cst_51 = arith.constant 1.000000e+00 : f32
    %199 = vector.broadcast %cst_51 : f32 to vector<8x32xf32>
    %200 = arith.addf %199, %198 : vector<8x32xf32>
    %201 = arith.divf %199, %200 : vector<8x32xf32>
    %202 = arith.mulf %193, %171 : vector<8x32xf32>
    %203 = arith.mulf %187, %195 : vector<8x32xf32>
    %204 = arith.addf %202, %203 : vector<8x32xf32>
    %205 = math.tanh %204 : vector<8x32xf32>
    %206 = arith.mulf %201, %205 : vector<8x32xf32>
    %207 = arith.index_cast %177 : i32 to index
    %c0_52 = arith.constant 0 : index
    %208 = vector.load %arg9[%207, %c0_52] : memref<64x32xf32, #tpu.memory_space<vmem>>, vector<8x32xf32>
    tpu.vector_store %arg9[%207, %c0_52], %206 {strides = array<i32>} : memref<64x32xf32, #tpu.memory_space<vmem>>, vector<8x32xf32>,
    %c6_i32 = arith.constant 6 : i32
    %c8_i32_53 = arith.constant 8 : i32
    %209 = arith.muli %c6_i32, %c8_i32_53 : i32
    %210 = tpu.assume_multiple %209, 8 : i32
    %211 = arith.index_cast %210 : i32 to index
    %c0_54 = arith.constant 0 : index
    %212 = vector.load %arg8[%211, %c0_54] : memref<64x128xf32, #tpu.memory_space<vmem>>, vector<8x128xf32>
    %cst_55 = arith.constant dense<0.000000e+00> : vector<8x128xf32>
    %213 = tpu.matmul %206, %8, %cst_55 {dimension_numbers = #tpu.dot_dimension_numbers<[1], [0], [0], [1], [0, 0, 1, 1], [], []>} : vector<8x32xf32>, vector<32x128xf32>, vector<8x128xf32> -> vector<8x128xf32>
    %214 = arith.addf %212, %213 : vector<8x128xf32>
    %215 = vector.extract_strided_slice %214 {offsets = [0, 0], sizes = [8, 32], strides = [1, 1]} : vector<8x128xf32> to vector<8x32xf32>
    %216 = arith.negf %215 : vector<8x32xf32>
    %217 = math.exp %216 : vector<8x32xf32>
    %cst_56 = arith.constant 1.000000e+00 : f32
    %218 = vector.broadcast %cst_56 : f32 to vector<8x32xf32>
    %219 = arith.addf %218, %217 : vector<8x32xf32>
    %220 = arith.divf %218, %219 : vector<8x32xf32>
    %221 = vector.extract_strided_slice %214 {offsets = [0, 32], sizes = [8, 32], strides = [1, 1]} : vector<8x128xf32> to vector<8x32xf32>
    %222 = arith.negf %221 : vector<8x32xf32>
    %223 = math.exp %222 : vector<8x32xf32>
    %cst_57 = arith.constant 1.000000e+00 : f32
    %224 = vector.broadcast %cst_57 : f32 to vector<8x32xf32>
    %225 = arith.addf %224, %223 : vector<8x32xf32>
    %226 = arith.divf %224, %225 : vector<8x32xf32>
    %227 = vector.extract_strided_slice %214 {offsets = [0, 64], sizes = [8, 32], strides = [1, 1]} : vector<8x128xf32> to vector<8x32xf32>
    %228 = math.tanh %227 : vector<8x32xf32>
    %229 = vector.extract_strided_slice %214 {offsets = [0, 96], sizes = [8, 32], strides = [1, 1]} : vector<8x128xf32> to vector<8x32xf32>
    %230 = arith.negf %229 : vector<8x32xf32>
    %231 = math.exp %230 : vector<8x32xf32>
    %cst_58 = arith.constant 1.000000e+00 : f32
    %232 = vector.broadcast %cst_58 : f32 to vector<8x32xf32>
    %233 = arith.addf %232, %231 : vector<8x32xf32>
    %234 = arith.divf %232, %233 : vector<8x32xf32>
    %235 = arith.mulf %226, %204 : vector<8x32xf32>
    %236 = arith.mulf %220, %228 : vector<8x32xf32>
    %237 = arith.addf %235, %236 : vector<8x32xf32>
    %238 = math.tanh %237 : vector<8x32xf32>
    %239 = arith.mulf %234, %238 : vector<8x32xf32>
    %240 = arith.index_cast %210 : i32 to index
    %c0_59 = arith.constant 0 : index
    %241 = vector.load %arg9[%240, %c0_59] : memref<64x32xf32, #tpu.memory_space<vmem>>, vector<8x32xf32>
    tpu.vector_store %arg9[%240, %c0_59], %239 {strides = array<i32>} : memref<64x32xf32, #tpu.memory_space<vmem>>, vector<8x32xf32>,
    %c7_i32 = arith.constant 7 : i32
    %c8_i32_60 = arith.constant 8 : i32
    %242 = arith.muli %c7_i32, %c8_i32_60 : i32
    %243 = tpu.assume_multiple %242, 8 : i32
    %244 = arith.index_cast %243 : i32 to index
    %c0_61 = arith.constant 0 : index
    %245 = vector.load %arg8[%244, %c0_61] : memref<64x128xf32, #tpu.memory_space<vmem>>, vector<8x128xf32>
    %cst_62 = arith.constant dense<0.000000e+00> : vector<8x128xf32>
    %246 = tpu.matmul %239, %8, %cst_62 {dimension_numbers = #tpu.dot_dimension_numbers<[1], [0], [0], [1], [0, 0, 1, 1], [], []>} : vector<8x32xf32>, vector<32x128xf32>, vector<8x128xf32> -> vector<8x128xf32>
    %247 = arith.addf %245, %246 : vector<8x128xf32>
    %248 = vector.extract_strided_slice %247 {offsets = [0, 0], sizes = [8, 32], strides = [1, 1]} : vector<8x128xf32> to vector<8x32xf32>
    %249 = arith.negf %248 : vector<8x32xf32>
    %250 = math.exp %249 : vector<8x32xf32>
    %cst_63 = arith.constant 1.000000e+00 : f32
    %251 = vector.broadcast %cst_63 : f32 to vector<8x32xf32>
    %252 = arith.addf %251, %250 : vector<8x32xf32>
    %253 = arith.divf %251, %252 : vector<8x32xf32>
    %254 = vector.extract_strided_slice %247 {offsets = [0, 32], sizes = [8, 32], strides = [1, 1]} : vector<8x128xf32> to vector<8x32xf32>
    %255 = arith.negf %254 : vector<8x32xf32>
    %256 = math.exp %255 : vector<8x32xf32>
    %cst_64 = arith.constant 1.000000e+00 : f32
    %257 = vector.broadcast %cst_64 : f32 to vector<8x32xf32>
    %258 = arith.addf %257, %256 : vector<8x32xf32>
    %259 = arith.divf %257, %258 : vector<8x32xf32>
    %260 = vector.extract_strided_slice %247 {offsets = [0, 64], sizes = [8, 32], strides = [1, 1]} : vector<8x128xf32> to vector<8x32xf32>
    %261 = math.tanh %260 : vector<8x32xf32>
    %262 = vector.extract_strided_slice %247 {offsets = [0, 96], sizes = [8, 32], strides = [1, 1]} : vector<8x128xf32> to vector<8x32xf32>
    %263 = arith.negf %262 : vector<8x32xf32>
    %264 = math.exp %263 : vector<8x32xf32>
    %cst_65 = arith.constant 1.000000e+00 : f32
    %265 = vector.broadcast %cst_65 : f32 to vector<8x32xf32>
    %266 = arith.addf %265, %264 : vector<8x32xf32>
    %267 = arith.divf %265, %266 : vector<8x32xf32>
    %268 = arith.mulf %259, %237 : vector<8x32xf32>
    %269 = arith.mulf %253, %261 : vector<8x32xf32>
    %270 = arith.addf %268, %269 : vector<8x32xf32>
    %271 = math.tanh %270 : vector<8x32xf32>
    %272 = arith.mulf %267, %271 : vector<8x32xf32>
    %273 = arith.index_cast %243 : i32 to index
    %c0_66 = arith.constant 0 : index
    %274 = vector.load %arg9[%273, %c0_66] : memref<64x32xf32, #tpu.memory_space<vmem>>, vector<8x32xf32>
    tpu.vector_store %arg9[%273, %c0_66], %272 {strides = array<i32>} : memref<64x32xf32, #tpu.memory_space<vmem>>, vector<8x32xf32>,
    %c8_i32_67 = arith.constant 8 : i32
    %c0_68 = arith.constant 0 : index
    %c0_69 = arith.constant 0 : index
    %275 = vector.load %arg9[%c0_68, %c0_69] : memref<64x32xf32, #tpu.memory_space<vmem>>, vector<64x32xf32>
    %c0_70 = arith.constant 0 : index
    %c0_71 = arith.constant 0 : index
    %276 = vector.load %arg5[%c0_70, %c0_71] : memref<32x16xf32, #tpu.memory_space<vmem>>, vector<32x16xf32>
    %cst_72 = arith.constant dense<0.000000e+00> : vector<64x16xf32>
    %277 = tpu.matmul %275, %276, %cst_72 {dimension_numbers = #tpu.dot_dimension_numbers<[1], [0], [0], [1], [0, 0, 1, 1], [], []>} : vector<64x32xf32>, vector<32x16xf32>, vector<64x16xf32> -> vector<64x16xf32>
    %c0_73 = arith.constant 0 : index
    %c0_74 = arith.constant 0 : index
    %278 = vector.load %arg6[%c0_73, %c0_74] : memref<1x16xf32, #tpu.memory_space<vmem>>, vector<1x16xf32>
    %279 = vector.broadcast %278 : vector<1x16xf32> to vector<64x16xf32>
    %280 = arith.addf %277, %279 : vector<64x16xf32>
    %281 = vector.shape_cast %280 : vector<64x16xf32> to vector<8x8x16xf32>
    %cst_75 = arith.constant dense<0xFF800000> : vector<8x16xf32>
    %282 = vector.multi_reduction <maximumf>, %281, %cst_75 [1] : vector<8x8x16xf32> to vector<8x16xf32>
    %283 = vector.shape_cast %282 : vector<8x16xf32> to vector<8x1x16xf32>
    %284 = vector.broadcast %283 : vector<8x1x16xf32> to vector<8x8x16xf32>
    %285 = arith.subf %281, %284 : vector<8x8x16xf32>
    %286 = math.exp %285 : vector<8x8x16xf32>
    %cst_76 = arith.constant dense<0.000000e+00> : vector<8x16xf32>
    %287 = vector.multi_reduction <add>, %286, %cst_76 [1] : vector<8x8x16xf32> to vector<8x16xf32>
    %288 = vector.shape_cast %287 : vector<8x16xf32> to vector<8x1x16xf32>
    %289 = math.log %288 : vector<8x1x16xf32>
    %290 = arith.addf %283, %289 : vector<8x1x16xf32>
    %291 = vector.broadcast %290 : vector<8x1x16xf32> to vector<8x8x16xf32>
    %292 = arith.subf %281, %291 : vector<8x8x16xf32>
    %c0_77 = arith.constant 0 : index
    %c0_78 = arith.constant 0 : index
    %c0_79 = arith.constant 0 : index
    %293 = vector.load %arg7[%c0_77, %c0_78, %c0_79] : memref<8x8x16xf32, #tpu.memory_space<vmem>>, vector<8x8x16xf32>
    tpu.vector_store %arg7[%c0_77, %c0_78, %c0_79], %292 {strides = array<i32>} : memref<8x8x16xf32, #tpu.memory_space<vmem>>, vector<8x8x16xf32>,
    return
  }
  func.func @transform_0(%arg0: i32) -> (i32, i32, i32) {
    %c0_i32 = arith.constant 0 : i32
    %c0_i32_0 = arith.constant 0 : i32
    %c0_i32_1 = arith.constant 0 : i32
    %c0_i32_2 = arith.constant 0 : i32
    return %c0_i32, %c0_i32_0, %c0_i32_1 : i32, i32, i32
  }
  func.func @transform_1(%arg0: i32) -> (i32, i32) {
    %c0_i32 = arith.constant 0 : i32
    %c0_i32_0 = arith.constant 0 : i32
    %c0_i32_1 = arith.constant 0 : i32
    return %c0_i32, %c0_i32_0 : i32, i32
  }
  func.func @transform_2(%arg0: i32) -> (i32, i32) {
    %c0_i32 = arith.constant 0 : i32
    %c0_i32_0 = arith.constant 0 : i32
    %c0_i32_1 = arith.constant 0 : i32
    return %c0_i32, %c0_i32_0 : i32, i32
  }
  func.func @transform_3(%arg0: i32) -> (i32, i32) {
    %c0_i32 = arith.constant 0 : i32
    %c0_i32_0 = arith.constant 0 : i32
    %c0_i32_1 = arith.constant 0 : i32
    return %c0_i32, %c0_i32_0 : i32, i32
  }
  func.func @transform_4(%arg0: i32) -> (i32, i32) {
    %c0_i32 = arith.constant 0 : i32
    %c0_i32_0 = arith.constant 0 : i32
    %c0_i32_1 = arith.constant 0 : i32
    return %c0_i32, %c0_i32_0 : i32, i32
  }
  func.func @transform_5(%arg0: i32) -> (i32, i32) {
    %c0_i32 = arith.constant 0 : i32
    %c0_i32_0 = arith.constant 0 : i32
    %c0_i32_1 = arith.constant 0 : i32
    return %c0_i32, %c0_i32_0 : i32, i32
  }
  func.func @transform_6(%arg0: i32) -> (i32, i32, i32) {
    %c0_i32 = arith.constant 0 : i32
    %c0_i32_0 = arith.constant 0 : i32
    %c0_i32_1 = arith.constant 0 : i32
    %c0_i32_2 = arith.constant 0 : i32
    return %c0_i32, %c0_i32_0, %c0_i32_1 : i32, i32, i32
  }
}

</mosaic_0001>

<llo_original>
// kernel: tpu_custom_call.1
$region0: #{tpu_custom_call.1}
  #allocation0 [shape = 'u32[]', space=smem, size = 0x4, offset = 0x4, fixed_abs, tag = 'smem constant byte address 0x4 - core index']
  #allocation1 [shape = 'u32[144,128]{1,0:T(1,128)}', space=vmem, size = 0x12000, scoped, tag = 'internal scratch']
  #allocation2 [shape = 'f32[64,128]{1,0:T(8,128)}', space=vmem, size = 0x8000, scoped, tag = 'scratch operand']
  #allocation3 [shape = 'f32[64,32]{1,0:T(8,128)}', space=vmem, size = 0x8000, scoped, tag = 'scratch operand']
  %s0 = inlined_call_operand.hbm [shape: f32[8,8,32], index: 0, kind: input, shape index: {}]
  %s1 = inlined_call_operand.vmem [shape: f32[32,128], index: 1, kind: input, shape index: {}]
  %s2 = inlined_call_operand.hbm [shape: f32[32,128], index: 2, kind: input, shape index: {}]
  %s3 = inlined_call_operand.vmem [shape: f32[1,128], index: 3, kind: input, shape index: {}]
  %s4 = inlined_call_operand.vmem [shape: f32[32,16], index: 4, kind: input, shape index: {}]
  %s5 = inlined_call_operand.vmem [shape: f32[1,16], index: 5, kind: input, shape index: {}]
  %s6 = inlined_call_operand.hbm [shape: f32[8,8,16], index: 6, kind: output, shape index: {}]
  %s7 = sld [smem:[#allocation0]]
  $region42: #{tpu_custom_call.1} parent=0
    _
  %s9 = ssub.s32 1, %s7
  %s10 = scalar_select 0, %s9, %s7
  $region1: #{tpu_custom_call.1} parent=0
    #allocation4 [shape = 'u8[32768]{0}', space=vmem, size = 0x8000, scoped, tag = 'input window, operand 0, single buffered']
    #allocation5 [shape = 's32[1]{0}', space=sflag, size = 0x4, scoped, tag = 'scoped memory for tpu_custom_call.1']
    #allocation6 [shape = 's32[1]{0}', space=sflag, size = 0x4, scoped, tag = 'scoped memory for tpu_custom_call.1']
    #allocation7 [shape = 'u8[16384]{0}', space=vmem, size = 0x4000, scoped, tag = 'input window, operand 2, single buffered']
    #allocation8 [shape = 's32[1]{0}', space=sflag, size = 0x4, scoped, tag = 'scoped memory for tpu_custom_call.1']
    #allocation9 [shape = 'u8[32768]{0}', space=vmem, size = 0x8000, scoped, tag = 'output window, operand 0, single buffered']
    %11 = vsyncpa [#allocation5], 0
    %12 = vsyncpa [#allocation8], 0
    %13 = vsyncpa [#allocation6], 0
    // Predicated region
    $region2: #{tpu_custom_call.1} parent=1 // pred_check
      _
    $region3: #{tpu_custom_call.1} parent=1 // pred_check_branch
      %15 = sbr.rel (0) target = $region5
    $region4: #{tpu_custom_call.1} parent=1 // pred_region
      %s17 = ssub.s32 1024, 1024
      %18 = vsyncadd [#allocation5], %s17
      %s19 = sshll.u32 [#allocation4], 4
      %s20 = int_to_ptr.vmem [resolvable:$true] %s19
      %25 = dma.hbm_to_vmem [thread:$0]  %s0, 1024, %s20, [#allocation5], 128, 128, 8
    $region5: #{tpu_custom_call.1} parent=1 // pred_fallthru
      _
    // Predicated region
    $region6: #{tpu_custom_call.1} parent=1 // pred_check
      _
    $region7: #{tpu_custom_call.1} parent=1 // pred_check_branch
      %27 = sbr.rel (0) target = $region9
    $region8: #{tpu_custom_call.1} parent=1 // pred_region
      _
    $region9: #{tpu_custom_call.1} parent=1 // pred_fallthru
      _
    // Predicated region
    $region10: #{tpu_custom_call.1} parent=1 // pred_check
      _
    $region11: #{tpu_custom_call.1} parent=1 // pred_check_branch
      %29 = sbr.rel (0) target = $region13
    $region12: #{tpu_custom_call.1} parent=1 // pred_region
      %s31 = ssub.s32 512, 512
      %32 = vsyncadd [#allocation8], %s31
      %s33 = sshll.u32 [#allocation7], 4
      %s34 = int_to_ptr.vmem [resolvable:$true] %s33
      %39 = dma.hbm_to_vmem [thread:$0]  %s2, 512, %s34, [#allocation8], 128, 128, 8
    $region13: #{tpu_custom_call.1} parent=1 // pred_fallthru
      _
    // Predicated region
    $region14: #{tpu_custom_call.1} parent=1 // pred_check
      _
    $region15: #{tpu_custom_call.1} parent=1 // pred_check_branch
      %41 = sbr.rel (0) target = $region17
    $region16: #{tpu_custom_call.1} parent=1 // pred_region
      _
    $region17: #{tpu_custom_call.1} parent=1 // pred_fallthru
      _
    // Predicated region
    $region18: #{tpu_custom_call.1} parent=1 // pred_check
      _
    $region19: #{tpu_custom_call.1} parent=1 // pred_check_branch
      %43 = sbr.rel (0) target = $region21
    $region20: #{tpu_custom_call.1} parent=1 // pred_region
      _
    $region21: #{tpu_custom_call.1} parent=1 // pred_fallthru
      _
    // Predicated region
    $region22: #{tpu_custom_call.1} parent=1 // pred_check
      _
    $region23: #{tpu_custom_call.1} parent=1 // pred_check_branch
      %45 = sbr.rel (0) target = $region25
    $region24: #{tpu_custom_call.1} parent=1 // pred_region
      _
    $region25: #{tpu_custom_call.1} parent=1 // pred_fallthru
      _
    // Predicated region
    $region26: #{tpu_custom_call.1} parent=1 // pred_check
      _
    $region27: #{tpu_custom_call.1} parent=1 // pred_check_branch
      %47 = sbr.rel (0) target = $region29
    $region28: #{tpu_custom_call.1} parent=1 // pred_region
      %48 = dma.done [#allocation5], 1024
    $region29: #{tpu_custom_call.1} parent=1 // pred_fallthru
      _
    // Predicated region
    $region30: #{tpu_custom_call.1} parent=1 // pred_check
      _
    $region31: #{tpu_custom_call.1} parent=1 // pred_check_branch
      %50 = sbr.rel (0) target = $region33
    $region32: #{tpu_custom_call.1} parent=1 // pred_region
      %51 = dma.done [#allocation8], 512
    $region33: #{tpu_custom_call.1} parent=1 // pred_fallthru
      _
    %v52 = vld [vmem:[#allocation4] sm:$0xff]
    %v53 = vld [vmem:[#allocation4 + $0x8] sm:$0xff]
    %v54 = vld [vmem:[#allocation4 + $0x10] sm:$0xff]
    %v55 = vld [vmem:[#allocation4 + $0x18] sm:$0xff]
    %v56 = vld [vmem:[#allocation4 + $0x20] sm:$0xff]
    %v57 = vld [vmem:[#allocation4 + $0x28] sm:$0xff]
    %v58 = vld [vmem:[#allocation4 + $0x30] sm:$0xff]
    %v59 = vld [vmem:[#allocation4 + $0x38] sm:$0xff]
    %v60 = vld [vmem:[%s1] sm:$0xff]
    %v61 = vld [vmem:[%s1 + $0x8] sm:$0xff]
    %v62 = vld [vmem:[%s1 + $0x10] sm:$0xff]
    %v63 = vld [vmem:[%s1 + $0x18] sm:$0xff]
    %v64 = vld [vmem:[%s3] sm:$0x1]
    %v66 = vlaneseq
    %v67 = vshrl.u32 %v66, 7
    %v68 = vsub.s32 0, %v67
    %v69 = vrot.slane %v64, %v68
    %vm71 = vcmask 261120
    %v73 = vsel %vm71, %v52, 0
    %v76 = vsel %vm71, %v53, 0
    %v79 = vsel %vm71, %v54, 0
    %v82 = vsel %vm71, %v55, 0
    %v85 = vsel %vm71, %v56, 0
    %v88 = vsel %vm71, %v57, 0
    %v91 = vsel %vm71, %v58, 0
    %v94 = vsel %vm71, %v59, 0
    %96 = vmatprep.subr.mxu0 0.0
    %97 = vmatpush1.msra.mxu0 %v60
    %98 = vmatprep.subr.mxu0 0.0
    %99 = vmatpush1.msra.mxu0 %v61
    %100 = vmatprep.subr.mxu0 0.0
    %101 = vmatpush1.msra.mxu0 %v62
    %102 = vmatprep.subr.mxu0 0.0
    %103 = vmatpush1.msra.mxu0 %v63
    %104 = vmatprep.subr.mxu0 0.0
    %105 = vmatpush1.msra.mxu0 0.0
    %106 = vmatprep.subr.mxu0 0.0
    %107 = vmatpush1.msra.mxu0 0.0
    %108 = vmatprep.subr.mxu0 0.0
    %109 = vmatpush1.msra.mxu0 0.0
    %110 = vmatprep.subr.mxu0 0.0
    %111 = vmatpush1.msra.mxu0 0.0
    %112 = vmatprep.subr.mxu0 0.0
    %113 = vmatpush1.msra.mxu0 0.0
    %114 = vmatprep.subr.mxu0 0.0
    %115 = vmatpush1.msra.mxu0 0.0
    %116 = vmatprep.subr.mxu0 0.0
    %117 = vmatpush1.msra.mxu0 0.0
    %118 = vmatprep.subr.mxu0 0.0
    %119 = vmatpush1.msra.mxu0 0.0
    %120 = vmatprep.subr.mxu0 0.0
    %121 = vmatpush1.msra.mxu0 0.0
    %122 = vmatprep.subr.mxu0 0.0
    %123 = vmatpush1.msra.mxu0 0.0
    %124 = vmatprep.subr.mxu0 0.0
    %125 = vmatpush1.msra.mxu0 0.0
    %126 = vmatprep.subr.mxu0 0.0
    %127 = vmatpush1.msra.mxu0 0.0
    %128 = vmatprep.subr.mxu0 0.0
    %129 = vmatpush1.msra.mxu0 0.0
    %130 = vmatprep.subr.mxu0 0.0
    %131 = vmatpush1.msra.mxu0 0.0
    %132 = vmatprep.subr.mxu0 0.0
    %133 = vmatpush1.msra.mxu0 0.0
    %134 = vmatprep.subr.mxu0 0.0
    %135 = vmatpush1.msra.mxu0 0.0
    %136 = vmatprep.subr.mxu0 0.0
    %137 = vmatpush1.msra.mxu0 0.0
    %138 = vmatprep.subr.mxu0 0.0
    %139 = vmatpush1.msra.mxu0 0.0
    %140 = vmatprep.subr.mxu0 0.0
    %141 = vmatpush1.msra.mxu0 0.0
    %142 = vmatprep.subr.mxu0 0.0
    %143 = vmatpush1.msra.mxu0 0.0
    %144 = vmatprep.subr.mxu0 0.0
    %145 = vmatpush1.msra.mxu0 0.0
    %146 = vmatprep.subr.mxu0 0.0
    %147 = vmatpush1.msra.mxu0 0.0
    %148 = vmatprep.subr.mxu0 0.0
    %149 = vmatpush1.msra.mxu0 0.0
    %150 = vmatprep.subr.mxu0 0.0
    %151 = vmatpush1.msra.mxu0 0.0
    %152 = vmatprep.subr.mxu0 0.0
    %153 = vmatpush1.msra.mxu0 0.0
    %154 = vmatprep.subr.mxu0 0.0
    %155 = vmatpush1.msra.mxu0 0.0
    %156 = vmatprep.subr.mxu0 0.0
    %157 = vmatpush1.msra.mxu0 0.0
    %158 = vmatprep.subr.mxu0 0.0
    %159 = vmatpush1.msra.mxu0 0.0
    %160 = vmatprep.mubr.f32.mxu0 0.0
    %161 = vmatmul.mubr.f32.gmra.mrb[0].mxu0 %v73
    %v162 = vpop.f32.mrb[0].mxu0
    %v163 = vadd.f32 %v69, %v162
    %v164 = vpop.f32.mrb[0].mxu0
    %165 = vmatprep.mubr.f32.mxu0 0.0
    %166 = vmatmul.mubr.f32.gmra.mrb[0].mxu0 %v76
    %v167 = vpop.f32.mrb[0].mxu0
    %v168 = vadd.f32 %v69, %v167
    %v169 = vpop.f32.mrb[0].mxu0
    %170 = vmatprep.mubr.f32.mxu0 0.0
    %171 = vmatmul.mubr.f32.gmra.mrb[0].mxu0 %v79
    %v172 = vpop.f32.mrb[0].mxu0
    %v173 = vadd.f32 %v69, %v172
    %v174 = vpop.f32.mrb[0].mxu0
    %175 = vmatprep.mubr.f32.mxu0 0.0
    %176 = vmatmul.mubr.f32.gmra.mrb[0].mxu0 %v82
    %v177 = vpop.f32.mrb[0].mxu0
    %v178 = vadd.f32 %v69, %v177
    %v179 = vpop.f32.mrb[0].mxu0
    %180 = vmatprep.mubr.f32.mxu0 0.0
    %181 = vmatmul.mubr.f32.gmra.mrb[0].mxu0 %v85
    %v182 = vpop.f32.mrb[0].mxu0
    %v183 = vadd.f32 %v69, %v182
    %v184 = vpop.f32.mrb[0].mxu0
    %185 = vmatprep.mubr.f32.mxu0 0.0
    %186 = vmatmul.mubr.f32.gmra.mrb[0].mxu0 %v88
    %v187 = vpop.f32.mrb[0].mxu0
    %v188 = vadd.f32 %v69, %v187
    %v189 = vpop.f32.mrb[0].mxu0
    %190 = vmatprep.mubr.f32.mxu0 0.0
    %191 = vmatmul.mubr.f32.gmra.mrb[0].mxu0 %v91
    %v192 = vpop.f32.mrb[0].mxu0
    %v193 = vadd.f32 %v69, %v192
    %v194 = vpop.f32.mrb[0].mxu0
    %195 = vmatprep.mubr.f32.mxu0 0.0
    %196 = vmatmul.mubr.f32.gmra.mrb[0].mxu0 %v94
    %v197 = vpop.f32.mrb[0].mxu0
    %v198 = vadd.f32 %v69, %v197
    %v199 = vpop.f32.mrb[0].mxu0
    %200 = vdwg.mxu0
    %201 = vst [vmem:[#allocation2] sm:$0xff] %v163
    %202 = vst [vmem:[#allocation2 + $0x8] sm:$0xff] %v168
    %203 = vst [vmem:[#allocation2 + $0x10] sm:$0xff] %v173
    %204 = vst [vmem:[#allocation2 + $0x18] sm:$0xff] %v178
    %205 = vst [vmem:[#allocation2 + $0x20] sm:$0xff] %v183
    %206 = vst [vmem:[#allocation2 + $0x28] sm:$0xff] %v188
    %207 = vst [vmem:[#allocation2 + $0x30] sm:$0xff] %v193
    %208 = vst [vmem:[#allocation2 + $0x38] sm:$0xff] %v198
    %v209 = vld [vmem:[#allocation7] sm:$0xff]
    %v210 = vld [vmem:[#allocation7 + $0x8] sm:$0xff]
    %v211 = vld [vmem:[#allocation7 + $0x10] sm:$0xff]
    %v212 = vld [vmem:[#allocation7 + $0x18] sm:$0xff]
    %v213 = vld [vmem:[#allocation2] sm:$0xff]
    %v215 = vsel %vm71, 0.0, 0
    %217 = vmatprep.subr.mxu0 0.0
    %218 = vmatpush1.msra.mxu0 %v209
    %219 = vmatprep.subr.mxu0 0.0
    %220 = vmatpush1.msra.mxu0 %v210
    %221 = vmatprep.subr.mxu0 0.0
    %222 = vmatpush1.msra.mxu0 %v211
    %223 = vmatprep.subr.mxu0 0.0
    %224 = vmatpush1.msra.mxu0 %v212
    %225 = vmatprep.subr.mxu0 0.0
    %226 = vmatpush1.msra.mxu0 0.0
    %227 = vmatprep.subr.mxu0 0.0
    %228 = vmatpush1.msra.mxu0 0.0
    %229 = vmatprep.subr.mxu0 0.0
    %230 = vmatpush1.msra.mxu0 0.0
    %231 = vmatprep.subr.mxu0 0.0
    %232 = vmatpush1.msra.mxu0 0.0
    %233 = vmatprep.subr.mxu0 0.0
    %234 = vmatpush1.msra.mxu0 0.0
    %235 = vmatprep.subr.mxu0 0.0
    %236 = vmatpush1.msra.mxu0 0.0
    %237 = vmatprep.subr.mxu0 0.0
    %238 = vmatpush1.msra.mxu0 0.0
    %239 = vmatprep.subr.mxu0 0.0
    %240 = vmatpush1.msra.mxu0 0.0
    %241 = vmatprep.subr.mxu0 0.0
    %242 = vmatpush1.msra.mxu0 0.0
    %243 = vmatprep.subr.mxu0 0.0
    %244 = vmatpush1.msra.mxu0 0.0
    %245 = vmatprep.subr.mxu0 0.0
    %246 = vmatpush1.msra.mxu0 0.0
    %247 = vmatprep.subr.mxu0 0.0
    %248 = vmatpush1.msra.mxu0 0.0
    %249 = vmatprep.subr.mxu0 0.0
    %250 = vmatpush1.msra.mxu0 0.0
    %251 = vmatprep.subr.mxu0 0.0
    %252 = vmatpush1.msra.mxu0 0.0
    %253 = vmatprep.subr.mxu0 0.0
    %254 = vmatpush1.msra.mxu0 0.0
    %255 = vmatprep.subr.mxu0 0.0
    %256 = vmatpush1.msra.mxu0 0.0
    %257 = vmatprep.subr.mxu0 0.0
    %258 = vmatpush1.msra.mxu0 0.0
    %259 = vmatprep.subr.mxu0 0.0
    %260 = vmatpush1.msra.mxu0 0.0
    %261 = vmatprep.subr.mxu0 0.0
    %262 = vmatpush1.msra.mxu0 0.0
    %263 = vmatprep.subr.mxu0 0.0
    %264 = vmatpush1.msra.mxu0 0.0
    %265 = vmatprep.subr.mxu0 0.0
    %266 = vmatpush1.msra.mxu0 0.0
    %267 = vmatprep.subr.mxu0 0.0
    %268 = vmatpush1.msra.mxu0 0.0
    %269 = vmatprep.subr.mxu0 0.0
    %270 = vmatpush1.msra.mxu0 0.0
    %271 = vmatprep.subr.mxu0 0.0
    %272 = vmatpush1.msra.mxu0 0.0
    %273 = vmatprep.subr.mxu0 0.0
    %274 = vmatpush1.msra.mxu0 0.0
    %275 = vmatprep.subr.mxu0 0.0
    %276 = vmatpush1.msra.mxu0 0.0
    %277 = vmatprep.subr.mxu0 0.0
    %278 = vmatpush1.msra.mxu0 0.0
    %279 = vmatprep.subr.mxu0 0.0
    %280 = vmatpush1.msra.mxu0 0.0
    %281 = vmatprep.mubr.f32.mxu0 0.0
    %282 = vmatmul.mubr.f32.gmra.mrb[0].mxu0 %v215
    %v283 = vpop.f32.mrb[0].mxu0
    %v284 = vadd.f32 0.0, %v283
    %v285 = vpop.f32.mrb[0].mxu0
    %286 = vdwg.mxu0
    %v287 = vadd.f32 %v213, %v284
    %v288 = vxor.u32 %v287, 2147483648
    %v289 = vmul.f32 %v288, 1.442695
    %v290 = vpow.pop %v289
    %v291 = vadd.f32 %v290, 1.0
    %v292 = vrcp.pop %v291
    %v293 = vmul.f32 1.0, %v292
    %v294 = vtanh.pop %v287
    %v295 = vmul.f32 %v293, 0.0
    %297 = vrot.lane.b32.xlu0 %v294, 64
    %v298 = vpop.permute.xlu0 %297
    %v300 = vmul.f32 %v293, %v298
    %302 = vrot.lane.b32.xlu0 %v300, 32
    %v303 = vpop.permute.xlu0 %302
    %v305 = vadd.f32 %v295, %v303
    %v306 = vtanh.pop %v305
    %308 = vrot.lane.b32.xlu0 %v306, 64
    %v309 = vpop.permute.xlu0 %308
    %v311 = vmul.f32 %v293, %v309
    %313 = vrot.lane.b32.xlu0 %v311, 32
    %v314 = vpop.permute.xlu0 %313
    %316 = vst.msk [vmem:[#allocation3] sm:$0xff] %vm71, %v314
    %s317 = scalar_lea.vmem [#allocation2], 8
    %v318 = vld [vmem:[%s317] sm:$0xff]
    %v319 = vsel %vm71, %v314, 0
    %321 = vmatprep.subr.mxu0 0.0
    %322 = vmatpush1.msra.mxu0 %v209
    %323 = vmatprep.subr.mxu0 0.0
    %324 = vmatpush1.msra.mxu0 %v210
    %325 = vmatprep.subr.mxu0 0.0
    %326 = vmatpush1.msra.mxu0 %v211
    %327 = vmatprep.subr.mxu0 0.0
    %328 = vmatpush1.msra.mxu0 %v212
    %329 = vmatprep.subr.mxu0 0.0
    %330 = vmatpush1.msra.mxu0 0.0
    %331 = vmatprep.subr.mxu0 0.0
    %332 = vmatpush1.msra.mxu0 0.0
    %333 = vmatprep.subr.mxu0 0.0
    %334 = vmatpush1.msra.mxu0 0.0
    %335 = vmatprep.subr.mxu0 0.0
    %336 = vmatpush1.msra.mxu0 0.0
    %337 = vmatprep.subr.mxu0 0.0
    %338 = vmatpush1.msra.mxu0 0.0
    %339 = vmatprep.subr.mxu0 0.0
    %340 = vmatpush1.msra.mxu0 0.0
    %341 = vmatprep.subr.mxu0 0.0
    %342 = vmatpush1.msra.mxu0 0.0
    %343 = vmatprep.subr.mxu0 0.0
    %344 = vmatpush1.msra.mxu0 0.0
    %345 = vmatprep.subr.mxu0 0.0
    %346 = vmatpush1.msra.mxu0 0.0
    %347 = vmatprep.subr.mxu0 0.0
    %348 = vmatpush1.msra.mxu0 0.0
    %349 = vmatprep.subr.mxu0 0.0
    %350 = vmatpush1.msra.mxu0 0.0
    %351 = vmatprep.subr.mxu0 0.0
    %352 = vmatpush1.msra.mxu0 0.0
    %353 = vmatprep.subr.mxu0 0.0
    %354 = vmatpush1.msra.mxu0 0.0
    %355 = vmatprep.subr.mxu0 0.0
    %356 = vmatpush1.msra.mxu0 0.0
    %357 = vmatprep.subr.mxu0 0.0
    %358 = vmatpush1.msra.mxu0 0.0
    %359 = vmatprep.subr.mxu0 0.0
    %360 = vmatpush1.msra.mxu0 0.0
    %361 = vmatprep.subr.mxu0 0.0
    %362 = vmatpush1.msra.mxu0 0.0
    %363 = vmatprep.subr.mxu0 0.0
    %364 = vmatpush1.msra.mxu0 0.0
    %365 = vmatprep.subr.mxu0 0.0
    %366 = vmatpush1.msra.mxu0 0.0
    %367 = vmatprep.subr.mxu0 0.0
    %368 = vmatpush1.msra.mxu0 0.0
    %369 = vmatprep.subr.mxu0 0.0
    %370 = vmatpush1.msra.mxu0 0.0
    %371 = vmatprep.subr.mxu0 0.0
    %372 = vmatpush1.msra.mxu0 0.0
    %373 = vmatprep.subr.mxu0 0.0
    %374 = vmatpush1.msra.mxu0 0.0
    %375 = vmatprep.subr.mxu0 0.0
    %376 = vmatpush1.msra.mxu0 0.0
    %377 = vmatprep.subr.mxu0 0.0
    %378 = vmatpush1.msra.mxu0 0.0
    %379 = vmatprep.subr.mxu0 0.0
    %380 = vmatpush1.msra.mxu0 0.0
    %381 = vmatprep.subr.mxu0 0.0
    %382 = vmatpush1.msra.mxu0 0.0
    %383 = vmatprep.subr.mxu0 0.0
    %384 = vmatpush1.msra.mxu0 0.0
    %385 = vmatprep.mubr.f32.mxu0 0.0
    %386 = vmatmul.mubr.f32.gmra.mrb[0].mxu0 %v319
    %v387 = vpop.f32.mrb[0].mxu0
    %v388 = vadd.f32 0.0, %v387
    %v389 = vpop.f32.mrb[0].mxu0
    %390 = vdwg.mxu0
    %v391 = vadd.f32 %v318, %v388
    %v392 = vxor.u32 %v391, 2147483648
    %v393 = vmul.f32 %v392, 1.442695
    %v394 = vpow.pop %v393
    %v395 = vadd.f32 %v394, 1.0
    %v396 = vrcp.pop %v395
    %v397 = vmul.f32 1.0, %v396
    %v398 = vtanh.pop %v391
    %v399 = vmul.f32 %v397, %v305
    %401 = vrot.lane.b32.xlu0 %v398, 64
    %v402 = vpop.permute.xlu0 %401
    %v404 = vmul.f32 %v397, %v402
    %406 = vrot.lane.b32.xlu0 %v404, 32
    %v407 = vpop.permute.xlu0 %406
    %v409 = vadd.f32 %v399, %v407
    %v410 = vtanh.pop %v409
    %412 = vrot.lane.b32.xlu0 %v410, 64
    %v413 = vpop.permute.xlu0 %412
    %v415 = vmul.f32 %v397, %v413
    %417 = vrot.lane.b32.xlu0 %v415, 32
    %v418 = vpop.permute.xlu0 %417
    %s420 = scalar_lea.vmem [#allocation3], 8
    %421 = vst.msk [vmem:[%s420] sm:$0xff] %vm71, %v418
    %s422 = scalar_lea.vmem [#allocation2], 16
    %v423 = vld [vmem:[%s422] sm:$0xff]
    %v424 = vsel %vm71, %v418, 0
    %426 = vmatprep.subr.mxu0 0.0
    %427 = vmatpush1.msra.mxu0 %v209
    %428 = vmatprep.subr.mxu0 0.0
    %429 = vmatpush1.msra.mxu0 %v210
    %430 = vmatprep.subr.mxu0 0.0
    %431 = vmatpush1.msra.mxu0 %v211
    %432 = vmatprep.subr.mxu0 0.0
    %433 = vmatpush1.msra.mxu0 %v212
    %434 = vmatprep.subr.mxu0 0.0
    %435 = vmatpush1.msra.mxu0 0.0
    %436 = vmatprep.subr.mxu0 0.0
    %437 = vmatpush1.msra.mxu0 0.0
    %438 = vmatprep.subr.mxu0 0.0
    %439 = vmatpush1.msra.mxu0 0.0
    %440 = vmatprep.subr.mxu0 0.0
    %441 = vmatpush1.msra.mxu0 0.0
    %442 = vmatprep.subr.mxu0 0.0
    %443 = vmatpush1.msra.mxu0 0.0
    %444 = vmatprep.subr.mxu0 0.0
    %445 = vmatpush1.msra.mxu0 0.0
    %446 = vmatprep.subr.mxu0 0.0
    %447 = vmatpush1.msra.mxu0 0.0
    %448 = vmatprep.subr.mxu0 0.0
    %449 = vmatpush1.msra.mxu0 0.0
    %450 = vmatprep.subr.mxu0 0.0
    %451 = vmatpush1.msra.mxu0 0.0
    %452 = vmatprep.subr.mxu0 0.0
    %453 = vmatpush1.msra.mxu0 0.0
    %454 = vmatprep.subr.mxu0 0.0
    %455 = vmatpush1.msra.mxu0 0.0
    %456 = vmatprep.subr.mxu0 0.0
    %457 = vmatpush1.msra.mxu0 0.0
    %458 = vmatprep.subr.mxu0 0.0
    %459 = vmatpush1.msra.mxu0 0.0
    %460 = vmatprep.subr.mxu0 0.0
    %461 = vmatpush1.msra.mxu0 0.0
    %462 = vmatprep.subr.mxu0 0.0
    %463 = vmatpush1.msra.mxu0 0.0
    %464 = vmatprep.subr.mxu0 0.0
    %465 = vmatpush1.msra.mxu0 0.0
    %466 = vmatprep.subr.mxu0 0.0
    %467 = vmatpush1.msra.mxu0 0.0
    %468 = vmatprep.subr.mxu0 0.0
    %469 = vmatpush1.msra.mxu0 0.0
    %470 = vmatprep.subr.mxu0 0.0
    %471 = vmatpush1.msra.mxu0 0.0
    %472 = vmatprep.subr.mxu0 0.0
    %473 = vmatpush1.msra.mxu0 0.0
    %474 = vmatprep.subr.mxu0 0.0
    %475 = vmatpush1.msra.mxu0 0.0
    %476 = vmatprep.subr.mxu0 0.0
    %477 = vmatpush1.msra.mxu0 0.0
    %478 = vmatprep.subr.mxu0 0.0
    %479 = vmatpush1.msra.mxu0 0.0
    %480 = vmatprep.subr.mxu0 0.0
    %481 = vmatpush1.msra.mxu0 0.0
    %482 = vmatprep.subr.mxu0 0.0
    %483 = vmatpush1.msra.mxu0 0.0
    %484 = vmatprep.subr.mxu0 0.0
    %485 = vmatpush1.msra.mxu0 0.0
    %486 = vmatprep.subr.mxu0 0.0
    %487 = vmatpush1.msra.mxu0 0.0
    %488 = vmatprep.subr.mxu0 0.0
    %489 = vmatpush1.msra.mxu0 0.0
    %490 = vmatprep.mubr.f32.mxu0 0.0
    %491 = vmatmul.mubr.f32.gmra.mrb[0].mxu0 %v424
    %v492 = vpop.f32.mrb[0].mxu0
    %v493 = vadd.f32 0.0, %v492
    %v494 = vpop.f32.mrb[0].mxu0
    %495 = vdwg.mxu0
    %v496 = vadd.f32 %v423, %v493
    %v497 = vxor.u32 %v496, 2147483648
    %v498 = vmul.f32 %v497, 1.442695
    %v499 = vpow.pop %v498
    %v500 = vadd.f32 %v499, 1.0
    %v501 = vrcp.pop %v500
    %v502 = vmul.f32 1.0, %v501
    %v503 = vtanh.pop %v496
    %v504 = vmul.f32 %v502, %v409
    %506 = vrot.lane.b32.xlu0 %v503, 64
    %v507 = vpop.permute.xlu0 %506
    %v509 = vmul.f32 %v502, %v507
    %511 = vrot.lane.b32.xlu0 %v509, 32
    %v512 = vpop.permute.xlu0 %511
    %v514 = vadd.f32 %v504, %v512
    %v515 = vtanh.pop %v514
    %517 = vrot.lane.b32.xlu0 %v515, 64
    %v518 = vpop.permute.xlu0 %517
    %v520 = vmul.f32 %v502, %v518
    %522 = vrot.lane.b32.xlu0 %v520, 32
    %v523 = vpop.permute.xlu0 %522
    %s525 = scalar_lea.vmem [#allocation3], 16
    %526 = vst.msk [vmem:[%s525] sm:$0xff] %vm71, %v523
    %s527 = scalar_lea.vmem [#allocation2], 24
    %v528 = vld [vmem:[%s527] sm:$0xff]
    %v529 = vsel %vm71, %v523, 0
    %531 = vmatprep.subr.mxu0 0.0
    %532 = vmatpush1.msra.mxu0 %v209
    %533 = vmatprep.subr.mxu0 0.0
    %534 = vmatpush1.msra.mxu0 %v210
    %535 = vmatprep.subr.mxu0 0.0
    %536 = vmatpush1.msra.mxu0 %v211
    %537 = vmatprep.subr.mxu0 0.0
    %538 = vmatpush1.msra.mxu0 %v212
    %539 = vmatprep.subr.mxu0 0.0
    %540 = vmatpush1.msra.mxu0 0.0
    %541 = vmatprep.subr.mxu0 0.0
    %542 = vmatpush1.msra.mxu0 0.0
    %543 = vmatprep.subr.mxu0 0.0
    %544 = vmatpush1.msra.mxu0 0.0
    %545 = vmatprep.subr.mxu0 0.0
    %546 = vmatpush1.msra.mxu0 0.0
    %547 = vmatprep.subr.mxu0 0.0
    %548 = vmatpush1.msra.mxu0 0.0
    %549 = vmatprep.subr.mxu0 0.0
    %550 = vmatpush1.msra.mxu0 0.0
    %551 = vmatprep.subr.mxu0 0.0
    %552 = vmatpush1.msra.mxu0 0.0
    %553 = vmatprep.subr.mxu0 0.0
    %554 = vmatpush1.msra.mxu0 0.0
    %555 = vmatprep.subr.mxu0 0.0
    %556 = vmatpush1.msra.mxu0 0.0
    %557 = vmatprep.subr.mxu0 0.0
    %558 = vmatpush1.msra.mxu0 0.0
    %559 = vmatprep.subr.mxu0 0.0
    %560 = vmatpush1.msra.mxu0 0.0
    %561 = vmatprep.subr.mxu0 0.0
    %562 = vmatpush1.msra.mxu0 0.0
    %563 = vmatprep.subr.mxu0 0.0
    %564 = vmatpush1.msra.mxu0 0.0
    %565 = vmatprep.subr.mxu0 0.0
    %566 = vmatpush1.msra.mxu0 0.0
    %567 = vmatprep.subr.mxu0 0.0
    %568 = vmatpush1.msra.mxu0 0.0
    %569 = vmatprep.subr.mxu0 0.0
    %570 = vmatpush1.msra.mxu0 0.0
    %571 = vmatprep.subr.mxu0 0.0
    %572 = vmatpush1.msra.mxu0 0.0
    %573 = vmatprep.subr.mxu0 0.0
    %574 = vmatpush1.msra.mxu0 0.0
    %575 = vmatprep.subr.mxu0 0.0
    %576 = vmatpush1.msra.mxu0 0.0
    %577 = vmatprep.subr.mxu0 0.0
    %578 = vmatpush1.msra.mxu0 0.0
    %579 = vmatprep.subr.mxu0 0.0
    %580 = vmatpush1.msra.mxu0 0.0
    %581 = vmatprep.subr.mxu0 0.0
    %582 = vmatpush1.msra.mxu0 0.0
    %583 = vmatprep.subr.mxu0 0.0
    %584 = vmatpush1.msra.mxu0 0.0
    %585 = vmatprep.subr.mxu0 0.0
    %586 = vmatpush1.msra.mxu0 0.0
    %587 = vmatprep.subr.mxu0 0.0
    %588 = vmatpush1.msra.mxu0 0.0
    %589 = vmatprep.subr.mxu0 0.0
    %590 = vmatpush1.msra.mxu0 0.0
    %591 = vmatprep.subr.mxu0 0.0
    %592 = vmatpush1.msra.mxu0 0.0
    %593 = vmatprep.subr.mxu0 0.0
    %594 = vmatpush1.msra.mxu0 0.0
    %595 = vmatprep.mubr.f32.mxu0 0.0
    %596 = vmatmul.mubr.f32.gmra.mrb[0].mxu0 %v529
    %v597 = vpop.f32.mrb[0].mxu0
    %v598 = vadd.f32 0.0, %v597
    %v599 = vpop.f32.mrb[0].mxu0
    %600 = vdwg.mxu0
    %v601 = vadd.f32 %v528, %v598
    %v602 = vxor.u32 %v601, 2147483648
    %v603 = vmul.f32 %v602, 1.442695
    %v604 = vpow.pop %v603
    %v605 = vadd.f32 %v604, 1.0
    %v606 = vrcp.pop %v605
    %v607 = vmul.f32 1.0, %v606
    %v608 = vtanh.pop %v601
    %v609 = vmul.f32 %v607, %v514
    %611 = vrot.lane.b32.xlu0 %v608, 64
    %v612 = vpop.permute.xlu0 %611
    %v614 = vmul.f32 %v607, %v612
    %616 = vrot.lane.b32.xlu0 %v614, 32
    %v617 = vpop.permute.xlu0 %616
    %v619 = vadd.f32 %v609, %v617
    %v620 = vtanh.pop %v619
    %622 = vrot.lane.b32.xlu0 %v620, 64
    %v623 = vpop.permute.xlu0 %622
    %v625 = vmul.f32 %v607, %v623
    %627 = vrot.lane.b32.xlu0 %v625, 32
    %v628 = vpop.permute.xlu0 %627
    %s630 = scalar_lea.vmem [#allocation3], 24
    %631 = vst.msk [vmem:[%s630] sm:$0xff] %vm71, %v628
    %s632 = scalar_lea.vmem [#allocation2], 32
    %v633 = vld [vmem:[%s632] sm:$0xff]
    %v634 = vsel %vm71, %v628, 0
    %636 = vmatprep.subr.mxu0 0.0
    %637 = vmatpush1.msra.mxu0 %v209
    %638 = vmatprep.subr.mxu0 0.0
    %639 = vmatpush1.msra.mxu0 %v210
    %640 = vmatprep.subr.mxu0 0.0
    %641 = vmatpush1.msra.mxu0 %v211
    %642 = vmatprep.subr.mxu0 0.0
    %643 = vmatpush1.msra.mxu0 %v212
    %644 = vmatprep.subr.mxu0 0.0
    %645 = vmatpush1.msra.mxu0 0.0
    %646 = vmatprep.subr.mxu0 0.0
    %647 = vmatpush1.msra.mxu0 0.0
    %648 = vmatprep.subr.mxu0 0.0
    %649 = vmatpush1.msra.mxu0 0.0
    %650 = vmatprep.subr.mxu0 0.0
    %651 = vmatpush1.msra.mxu0 0.0
    %652 = vmatprep.subr.mxu0 0.0
    %653 = vmatpush1.msra.mxu0 0.0
    %654 = vmatprep.subr.mxu0 0.0
    %655 = vmatpush1.msra.mxu0 0.0
    %656 = vmatprep.subr.mxu0 0.0
    %657 = vmatpush1.msra.mxu0 0.0
    %658 = vmatprep.subr.mxu0 0.0
    %659 = vmatpush1.msra.mxu0 0.0
    %660 = vmatprep.subr.mxu0 0.0
    %661 = vmatpush1.msra.mxu0 0.0
    %662 = vmatprep.subr.mxu0 0.0
    %663 = vmatpush1.msra.mxu0 0.0
    %664 = vmatprep.subr.mxu0 0.0
    %665 = vmatpush1.msra.mxu0 0.0
    %666 = vmatprep.subr.mxu0 0.0
    %667 = vmatpush1.msra.mxu0 0.0
    %668 = vmatprep.subr.mxu0 0.0
    %669 = vmatpush1.msra.mxu0 0.0
    %670 = vmatprep.subr.mxu0 0.0
    %671 = vmatpush1.msra.mxu0 0.0
    %672 = vmatprep.subr.mxu0 0.0
    %673 = vmatpush1.msra.mxu0 0.0
    %674 = vmatprep.subr.mxu0 0.0
    %675 = vmatpush1.msra.mxu0 0.0
    %676 = vmatprep.subr.mxu0 0.0
    %677 = vmatpush1.msra.mxu0 0.0
    %678 = vmatprep.subr.mxu0 0.0
    %679 = vmatpush1.msra.mxu0 0.0
    %680 = vmatprep.subr.mxu0 0.0
    %681 = vmatpush1.msra.mxu0 0.0
    %682 = vmatprep.subr.mxu0 0.0
    %683 = vmatpush1.msra.mxu0 0.0
    %684 = vmatprep.subr.mxu0 0.0
    %685 = vmatpush1.msra.mxu0 0.0
    %686 = vmatprep.subr.mxu0 0.0
    %687 = vmatpush1.msra.mxu0 0.0
    %688 = vmatprep.subr.mxu0 0.0
    %689 = vmatpush1.msra.mxu0 0.0
    %690 = vmatprep.subr.mxu0 0.0
    %691 = vmatpush1.msra.mxu0 0.0
    %692 = vmatprep.subr.mxu0 0.0
    %693 = vmatpush1.msra.mxu0 0.0
    %694 = vmatprep.subr.mxu0 0.0
    %695 = vmatpush1.msra.mxu0 0.0
    %696 = vmatprep.subr.mxu0 0.0
    %697 = vmatpush1.msra.mxu0 0.0
    %698 = vmatprep.subr.mxu0 0.0
    %699 = vmatpush1.msra.mxu0 0.0
    %700 = vmatprep.mubr.f32.mxu0 0.0
    %701 = vmatmul.mubr.f32.gmra.mrb[0].mxu0 %v634
    %v702 = vpop.f32.mrb[0].mxu0
    %v703 = vadd.f32 0.0, %v702
    %v704 = vpop.f32.mrb[0].mxu0
    %705 = vdwg.mxu0
    %v706 = vadd.f32 %v633, %v703
    %v707 = vxor.u32 %v706, 2147483648
    %v708 = vmul.f32 %v707, 1.442695
    %v709 = vpow.pop %v708
    %v710 = vadd.f32 %v709, 1.0
    %v711 = vrcp.pop %v710
    %v712 = vmul.f32 1.0, %v711
    %v713 = vtanh.pop %v706
    %v714 = vmul.f32 %v712, %v619
    %716 = vrot.lane.b32.xlu0 %v713, 64
    %v717 = vpop.permute.xlu0 %716
    %v719 = vmul.f32 %v712, %v717
    %721 = vrot.lane.b32.xlu0 %v719, 32
    %v722 = vpop.permute.xlu0 %721
    %v724 = vadd.f32 %v714, %v722
    %v725 = vtanh.pop %v724
    %727 = vrot.lane.b32.xlu0 %v725, 64
    %v728 = vpop.permute.xlu0 %727
    %v730 = vmul.f32 %v712, %v728
    %732 = vrot.lane.b32.xlu0 %v730, 32
    %v733 = vpop.permute.xlu0 %732
    %s735 = scalar_lea.vmem [#allocation3], 32
    %736 = vst.msk [vmem:[%s735] sm:$0xff] %vm71, %v733
    %s737 = scalar_lea.vmem [#allocation2], 40
    %v738 = vld [vmem:[%s737] sm:$0xff]
    %v739 = vsel %vm71, %v733, 0
    %741 = vmatprep.subr.mxu0 0.0
    %742 = vmatpush1.msra.mxu0 %v209
    %743 = vmatprep.subr.mxu0 0.0
    %744 = vmatpush1.msra.mxu0 %v210
    %745 = vmatprep.subr.mxu0 0.0
    %746 = vmatpush1.msra.mxu0 %v211
    %747 = vmatprep.subr.mxu0 0.0
    %748 = vmatpush1.msra.mxu0 %v212
    %749 = vmatprep.subr.mxu0 0.0
    %750 = vmatpush1.msra.mxu0 0.0
    %751 = vmatprep.subr.mxu0 0.0
    %752 = vmatpush1.msra.mxu0 0.0
    %753 = vmatprep.subr.mxu0 0.0
    %754 = vmatpush1.msra.mxu0 0.0
    %755 = vmatprep.subr.mxu0 0.0
    %756 = vmatpush1.msra.mxu0 0.0
    %757 = vmatprep.subr.mxu0 0.0
    %758 = vmatpush1.msra.mxu0 0.0
    %759 = vmatprep.subr.mxu0 0.0
    %760 = vmatpush1.msra.mxu0 0.0
    %761 = vmatprep.subr.mxu0 0.0
    %762 = vmatpush1.msra.mxu0 0.0
    %763 = vmatprep.subr.mxu0 0.0
    %764 = vmatpush1.msra.mxu0 0.0
    %765 = vmatprep.subr.mxu0 0.0
    %766 = vmatpush1.msra.mxu0 0.0
    %767 = vmatprep.subr.mxu0 0.0
    %768 = vmatpush1.msra.mxu0 0.0
    %769 = vmatprep.subr.mxu0 0.0
    %770 = vmatpush1.msra.mxu0 0.0
    %771 = vmatprep.subr.mxu0 0.0
    %772 = vmatpush1.msra.mxu0 0.0
    %773 = vmatprep.subr.mxu0 0.0
    %774 = vmatpush1.msra.mxu0 0.0
    %775 = vmatprep.subr.mxu0 0.0
    %776 = vmatpush1.msra.mxu0 0.0
    %777 = vmatprep.subr.mxu0 0.0
    %778 = vmatpush1.msra.mxu0 0.0
    %779 = vmatprep.subr.mxu0 0.0
    %780 = vmatpush1.msra.mxu0 0.0
    %781 = vmatprep.subr.mxu0 0.0
    %782 = vmatpush1.msra.mxu0 0.0
    %783 = vmatprep.subr.mxu0 0.0
    %784 = vmatpush1.msra.mxu0 0.0
    %785 = vmatprep.subr.mxu0 0.0
    %786 = vmatpush1.msra.mxu0 0.0
    %787 = vmatprep.subr.mxu0 0.0
    %788 = vmatpush1.msra.mxu0 0.0
    %789 = vmatprep.subr.mxu0 0.0
    %790 = vmatpush1.msra.mxu0 0.0
    %791 = vmatprep.subr.mxu0 0.0
    %792 = vmatpush1.msra.mxu0 0.0
    %793 = vmatprep.subr.mxu0 0.0
    %794 = vmatpush1.msra.mxu0 0.0
    %795 = vmatprep.subr.mxu0 0.0
    %796 = vmatpush1.msra.mxu0 0.0
    %797 = vmatprep.subr.mxu0 0.0
    %798 = vmatpush1.msra.mxu0 0.0
    %799 = vmatprep.subr.mxu0 0.0
    %800 = vmatpush1.msra.mxu0 0.0
    %801 = vmatprep.subr.mxu0 0.0
    %802 = vmatpush1.msra.mxu0 0.0
    %803 = vmatprep.subr.mxu0 0.0
    %804 = vmatpush1.msra.mxu0 0.0
    %805 = vmatprep.mubr.f32.mxu0 0.0
    %806 = vmatmul.mubr.f32.gmra.mrb[0].mxu0 %v739
    %v807 = vpop.f32.mrb[0].mxu0
    %v808 = vadd.f32 0.0, %v807
    %v809 = vpop.f32.mrb[0].mxu0
    %810 = vdwg.mxu0
    %v811 = vadd.f32 %v738, %v808
    %v812 = vxor.u32 %v811, 2147483648
    %v813 = vmul.f32 %v812, 1.442695
    %v814 = vpow.pop %v813
    %v815 = vadd.f32 %v814, 1.0
    %v816 = vrcp.pop %v815
    %v817 = vmul.f32 1.0, %v816
    %v818 = vtanh.pop %v811
    %v819 = vmul.f32 %v817, %v724
    %821 = vrot.lane.b32.xlu0 %v818, 64
    %v822 = vpop.permute.xlu0 %821
    %v824 = vmul.f32 %v817, %v822
    %826 = vrot.lane.b32.xlu0 %v824, 32
    %v827 = vpop.permute.xlu0 %826
    %v829 = vadd.f32 %v819, %v827
    %v830 = vtanh.pop %v829
    %832 = vrot.lane.b32.xlu0 %v830, 64
    %v833 = vpop.permute.xlu0 %832
    %v835 = vmul.f32 %v817, %v833
    %837 = vrot.lane.b32.xlu0 %v835, 32
    %v838 = vpop.permute.xlu0 %837
    %s840 = scalar_lea.vmem [#allocation3], 40
    %841 = vst.msk [vmem:[%s840] sm:$0xff] %vm71, %v838
    %s842 = scalar_lea.vmem [#allocation2], 48
    %v843 = vld [vmem:[%s842] sm:$0xff]
    %v844 = vsel %vm71, %v838, 0
    %846 = vmatprep.subr.mxu0 0.0
    %847 = vmatpush1.msra.mxu0 %v209
    %848 = vmatprep.subr.mxu0 0.0
    %849 = vmatpush1.msra.mxu0 %v210
    %850 = vmatprep.subr.mxu0 0.0
    %851 = vmatpush1.msra.mxu0 %v211
    %852 = vmatprep.subr.mxu0 0.0
    %853 = vmatpush1.msra.mxu0 %v212
    %854 = vmatprep.subr.mxu0 0.0
    %855 = vmatpush1.msra.mxu0 0.0
    %856 = vmatprep.subr.mxu0 0.0
    %857 = vmatpush1.msra.mxu0 0.0
    %858 = vmatprep.subr.mxu0 0.0
    %859 = vmatpush1.msra.mxu0 0.0
    %860 = vmatprep.subr.mxu0 0.0
    %861 = vmatpush1.msra.mxu0 0.0
    %862 = vmatprep.subr.mxu0 0.0
    %863 = vmatpush1.msra.mxu0 0.0
    %864 = vmatprep.subr.mxu0 0.0
    %865 = vmatpush1.msra.mxu0 0.0
    %866 = vmatprep.subr.mxu0 0.0
    %867 = vmatpush1.msra.mxu0 0.0
    %868 = vmatprep.subr.mxu0 0.0
    %869 = vmatpush1.msra.mxu0 0.0
    %870 = vmatprep.subr.mxu0 0.0
    %871 = vmatpush1.msra.mxu0 0.0
    %872 = vmatprep.subr.mxu0 0.0
    %873 = vmatpush1.msra.mxu0 0.0
    %874 = vmatprep.subr.mxu0 0.0
    %875 = vmatpush1.msra.mxu0 0.0
    %876 = vmatprep.subr.mxu0 0.0
    %877 = vmatpush1.msra.mxu0 0.0
    %878 = vmatprep.subr.mxu0 0.0
    %879 = vmatpush1.msra.mxu0 0.0
    %880 = vmatprep.subr.mxu0 0.0
    %881 = vmatpush1.msra.mxu0 0.0
    %882 = vmatprep.subr.mxu0 0.0
    %883 = vmatpush1.msra.mxu0 0.0
    %884 = vmatprep.subr.mxu0 0.0
    %885 = vmatpush1.msra.mxu0 0.0
    %886 = vmatprep.subr.mxu0 0.0
    %887 = vmatpush1.msra.mxu0 0.0
    %888 = vmatprep.subr.mxu0 0.0
    %889 = vmatpush1.msra.mxu0 0.0
    %890 = vmatprep.subr.mxu0 0.0
    %891 = vmatpush1.msra.mxu0 0.0
    %892 = vmatprep.subr.mxu0 0.0
    %893 = vmatpush1.msra.mxu0 0.0
    %894 = vmatprep.subr.mxu0 0.0
    %895 = vmatpush1.msra.mxu0 0.0
    %896 = vmatprep.subr.mxu0 0.0
    %897 = vmatpush1.msra.mxu0 0.0
    %898 = vmatprep.subr.mxu0 0.0
    %899 = vmatpush1.msra.mxu0 0.0
    %900 = vmatprep.subr.mxu0 0.0
    %901 = vmatpush1.msra.mxu0 0.0
    %902 = vmatprep.subr.mxu0 0.0
    %903 = vmatpush1.msra.mxu0 0.0
    %904 = vmatprep.subr.mxu0 0.0
    %905 = vmatpush1.msra.mxu0 0.0
    %906 = vmatprep.subr.mxu0 0.0
    %907 = vmatpush1.msra.mxu0 0.0
    %908 = vmatprep.subr.mxu0 0.0
    %909 = vmatpush1.msra.mxu0 0.0
    %910 = vmatprep.mubr.f32.mxu0 0.0
    %911 = vmatmul.mubr.f32.gmra.mrb[0].mxu0 %v844
    %v912 = vpop.f32.mrb[0].mxu0
    %v913 = vadd.f32 0.0, %v912
    %v914 = vpop.f32.mrb[0].mxu0
    %915 = vdwg.mxu0
    %v916 = vadd.f32 %v843, %v913
    %v917 = vxor.u32 %v916, 2147483648
    %v918 = vmul.f32 %v917, 1.442695
    %v919 = vpow.pop %v918
    %v920 = vadd.f32 %v919, 1.0
    %v921 = vrcp.pop %v920
    %v922 = vmul.f32 1.0, %v921
    %v923 = vtanh.pop %v916
    %v924 = vmul.f32 %v922, %v829
    %926 = vrot.lane.b32.xlu0 %v923, 64
    %v927 = vpop.permute.xlu0 %926
    %v929 = vmul.f32 %v922, %v927
    %931 = vrot.lane.b32.xlu0 %v929, 32
    %v932 = vpop.permute.xlu0 %931
    %v934 = vadd.f32 %v924, %v932
    %v935 = vtanh.pop %v934
    %937 = vrot.lane.b32.xlu0 %v935, 64
    %v938 = vpop.permute.xlu0 %937
    %v940 = vmul.f32 %v922, %v938
    %942 = vrot.lane.b32.xlu0 %v940, 32
    %v943 = vpop.permute.xlu0 %942
    %s945 = scalar_lea.vmem [#allocation3], 48
    %946 = vst.msk [vmem:[%s945] sm:$0xff] %vm71, %v943
    %s947 = scalar_lea.vmem [#allocation2], 56
    %v948 = vld [vmem:[%s947] sm:$0xff]
    %v949 = vsel %vm71, %v943, 0
    %951 = vmatprep.subr.mxu0 0.0
    %952 = vmatpush1.msra.mxu0 %v209
    %953 = vmatprep.subr.mxu0 0.0
    %954 = vmatpush1.msra.mxu0 %v210
    %955 = vmatprep.subr.mxu0 0.0
    %956 = vmatpush1.msra.mxu0 %v211
    %957 = vmatprep.subr.mxu0 0.0
    %958 = vmatpush1.msra.mxu0 %v212
    %959 = vmatprep.subr.mxu0 0.0
    %960 = vmatpush1.msra.mxu0 0.0
    %961 = vmatprep.subr.mxu0 0.0
    %962 = vmatpush1.msra.mxu0 0.0
    %963 = vmatprep.subr.mxu0 0.0
    %964 = vmatpush1.msra.mxu0 0.0
    %965 = vmatprep.subr.mxu0 0.0
    %966 = vmatpush1.msra.mxu0 0.0
    %967 = vmatprep.subr.mxu0 0.0
    %968 = vmatpush1.msra.mxu0 0.0
    %969 = vmatprep.subr.mxu0 0.0
    %970 = vmatpush1.msra.mxu0 0.0
    %971 = vmatprep.subr.mxu0 0.0
    %972 = vmatpush1.msra.mxu0 0.0
    %973 = vmatprep.subr.mxu0 0.0
    %974 = vmatpush1.msra.mxu0 0.0
    %975 = vmatprep.subr.mxu0 0.0
    %976 = vmatpush1.msra.mxu0 0.0
    %977 = vmatprep.subr.mxu0 0.0
    %978 = vmatpush1.msra.mxu0 0.0
    %979 = vmatprep.subr.mxu0 0.0
    %980 = vmatpush1.msra.mxu0 0.0
    %981 = vmatprep.subr.mxu0 0.0
    %982 = vmatpush1.msra.mxu0 0.0
    %983 = vmatprep.subr.mxu0 0.0
    %984 = vmatpush1.msra.mxu0 0.0
    %985 = vmatprep.subr.mxu0 0.0
    %986 = vmatpush1.msra.mxu0 0.0
    %987 = vmatprep.subr.mxu0 0.0
    %988 = vmatpush1.msra.mxu0 0.0
    %989 = vmatprep.subr.mxu0 0.0
    %990 = vmatpush1.msra.mxu0 0.0
    %991 = vmatprep.subr.mxu0 0.0
    %992 = vmatpush1.msra.mxu0 0.0
    %993 = vmatprep.subr.mxu0 0.0
    %994 = vmatpush1.msra.mxu0 0.0
    %995 = vmatprep.subr.mxu0 0.0
    %996 = vmatpush1.msra.mxu0 0.0
    %997 = vmatprep.subr.mxu0 0.0
    %998 = vmatpush1.msra.mxu0 0.0
    %999 = vmatprep.subr.mxu0 0.0
    %1000 = vmatpush1.msra.mxu0 0.0
    %1001 = vmatprep.subr.mxu0 0.0
    %1002 = vmatpush1.msra.mxu0 0.0
    %1003 = vmatprep.subr.mxu0 0.0
    %1004 = vmatpush1.msra.mxu0 0.0
    %1005 = vmatprep.subr.mxu0 0.0
    %1006 = vmatpush1.msra.mxu0 0.0
    %1007 = vmatprep.subr.mxu0 0.0
    %1008 = vmatpush1.msra.mxu0 0.0
    %1009 = vmatprep.subr.mxu0 0.0
    %1010 = vmatpush1.msra.mxu0 0.0
    %1011 = vmatprep.subr.mxu0 0.0
    %1012 = vmatpush1.msra.mxu0 0.0
    %1013 = vmatprep.subr.mxu0 0.0
    %1014 = vmatpush1.msra.mxu0 0.0
    %1015 = vmatprep.mubr.f32.mxu0 0.0
    %1016 = vmatmul.mubr.f32.gmra.mrb[0].mxu0 %v949
    %v1017 = vpop.f32.mrb[0].mxu0
    %v1018 = vadd.f32 0.0, %v1017
    %v1019 = vpop.f32.mrb[0].mxu0
    %1020 = vdwg.mxu0
    %v1021 = vadd.f32 %v948, %v1018
    %v1022 = vxor.u32 %v1021, 2147483648
    %v1023 = vmul.f32 %v1022, 1.442695
    %v1024 = vpow.pop %v1023
    %v1025 = vadd.f32 %v1024, 1.0
    %v1026 = vrcp.pop %v1025
    %v1027 = vmul.f32 1.0, %v1026
    %v1028 = vtanh.pop %v1021
    %v1029 = vmul.f32 %v1027, %v934
    %1031 = vrot.lane.b32.xlu0 %v1028, 64
    %v1032 = vpop.permute.xlu0 %1031
    %v1034 = vmul.f32 %v1027, %v1032
    %1036 = vrot.lane.b32.xlu0 %v1034, 32
    %v1037 = vpop.permute.xlu0 %1036
    %v1039 = vadd.f32 %v1029, %v1037
    %v1040 = vtanh.pop %v1039
    %1042 = vrot.lane.b32.xlu0 %v1040, 64
    %v1043 = vpop.permute.xlu0 %1042
    %v1045 = vmul.f32 %v1027, %v1043
    %1047 = vrot.lane.b32.xlu0 %v1045, 32
    %v1048 = vpop.permute.xlu0 %1047
    %s1050 = scalar_lea.vmem [#allocation3], 56
    %1051 = vst.msk [vmem:[%s1050] sm:$0xff] %vm71, %v1048
    %v1052 = vld [vmem:[#allocation3] sm:$0xff]
    %v1053 = vld [vmem:[#allocation3 + $0x8] sm:$0xff]
    %v1054 = vld [vmem:[#allocation3 + $0x10] sm:$0xff]
    %v1055 = vld [vmem:[#allocation3 + $0x18] sm:$0xff]
    %v1056 = vld [vmem:[#allocation3 + $0x20] sm:$0xff]
    %v1057 = vld [vmem:[#allocation3 + $0x28] sm:$0xff]
    %v1058 = vld [vmem:[#allocation3 + $0x30] sm:$0xff]
    %v1059 = vld [vmem:[#allocation3 + $0x38] sm:$0xff]
    %v1060 = vld [vmem:[%s4] sm:$0xff]
    %v1061 = vld [vmem:[%s4 + $0x8] sm:$0xff]
    %v1062 = vld [vmem:[%s4 + $0x10] sm:$0xff]
    %v1063 = vld [vmem:[%s4 + $0x18] sm:$0xff]
    %v1064 = vld [vmem:[%s5] sm:$0x1]
    %v1066 = vlaneseq
    %v1067 = vshrl.u32 %v1066, 7
    %v1068 = vsub.s32 0, %v1067
    %v1069 = vrot.slane %v1064, %v1068
    %v1072 = vsel %vm71, %v1052, 0
    %v1075 = vsel %vm71, %v1053, 0
    %v1078 = vsel %vm71, %v1054, 0
    %v1081 = vsel %vm71, %v1055, 0
    %v1084 = vsel %vm71, %v1056, 0
    %v1087 = vsel %vm71, %v1057, 0
    %v1090 = vsel %vm71, %v1058, 0
    %v1093 = vsel %vm71, %v1059, 0
    %1095 = vmatprep.subr.mxu0 0.0
    %1096 = vmatpush1.msra.mxu0 %v1060
    %1097 = vmatprep.subr.mxu0 0.0
    %1098 = vmatpush1.msra.mxu0 %v1061
    %1099 = vmatprep.subr.mxu0 0.0
    %1100 = vmatpush1.msra.mxu0 %v1062
    %1101 = vmatprep.subr.mxu0 0.0
    %1102 = vmatpush1.msra.mxu0 %v1063
    %1103 = vmatprep.subr.mxu0 0.0
    %1104 = vmatpush1.msra.mxu0 0.0
    %1105 = vmatprep.subr.mxu0 0.0
    %1106 = vmatpush1.msra.mxu0 0.0
    %1107 = vmatprep.subr.mxu0 0.0
    %1108 = vmatpush1.msra.mxu0 0.0
    %1109 = vmatprep.subr.mxu0 0.0
    %1110 = vmatpush1.msra.mxu0 0.0
    %1111 = vmatprep.subr.mxu0 0.0
    %1112 = vmatpush1.msra.mxu0 0.0
    %1113 = vmatprep.subr.mxu0 0.0
    %1114 = vmatpush1.msra.mxu0 0.0
    %1115 = vmatprep.subr.mxu0 0.0
    %1116 = vmatpush1.msra.mxu0 0.0
    %1117 = vmatprep.subr.mxu0 0.0
    %1118 = vmatpush1.msra.mxu0 0.0
    %1119 = vmatprep.subr.mxu0 0.0
    %1120 = vmatpush1.msra.mxu0 0.0
    %1121 = vmatprep.subr.mxu0 0.0
    %1122 = vmatpush1.msra.mxu0 0.0
    %1123 = vmatprep.subr.mxu0 0.0
    %1124 = vmatpush1.msra.mxu0 0.0
    %1125 = vmatprep.subr.mxu0 0.0
    %1126 = vmatpush1.msra.mxu0 0.0
    %1127 = vmatprep.subr.mxu0 0.0
    %1128 = vmatpush1.msra.mxu0 0.0
    %1129 = vmatprep.subr.mxu0 0.0
    %1130 = vmatpush1.msra.mxu0 0.0
    %1131 = vmatprep.subr.mxu0 0.0
    %1132 = vmatpush1.msra.mxu0 0.0
    %1133 = vmatprep.subr.mxu0 0.0
    %1134 = vmatpush1.msra.mxu0 0.0
    %1135 = vmatprep.subr.mxu0 0.0
    %1136 = vmatpush1.msra.mxu0 0.0
    %1137 = vmatprep.subr.mxu0 0.0
    %1138 = vmatpush1.msra.mxu0 0.0
    %1139 = vmatprep.subr.mxu0 0.0
    %1140 = vmatpush1.msra.mxu0 0.0
    %1141 = vmatprep.subr.mxu0 0.0
    %1142 = vmatpush1.msra.mxu0 0.0
    %1143 = vmatprep.subr.mxu0 0.0
    %1144 = vmatpush1.msra.mxu0 0.0
    %1145 = vmatprep.subr.mxu0 0.0
    %1146 = vmatpush1.msra.mxu0 0.0
    %1147 = vmatprep.subr.mxu0 0.0
    %1148 = vmatpush1.msra.mxu0 0.0
    %1149 = vmatprep.subr.mxu0 0.0
    %1150 = vmatpush1.msra.mxu0 0.0
    %1151 = vmatprep.subr.mxu0 0.0
    %1152 = vmatpush1.msra.mxu0 0.0
    %1153 = vmatprep.subr.mxu0 0.0
    %1154 = vmatpush1.msra.mxu0 0.0
    %1155 = vmatprep.subr.mxu0 0.0
    %1156 = vmatpush1.msra.mxu0 0.0
    %1157 = vmatprep.subr.mxu0 0.0
    %1158 = vmatpush1.msra.mxu0 0.0
    %1159 = vmatprep.mubr.f32.mxu0 0.0
    %1160 = vmatmul.mubr.f32.gmra.mrb[0].mxu0 %v1072
    %v1161 = vpop.f32.mrb[0].mxu0
    %v1162 = vadd.f32 %v1069, %v1161
    %v1163 = vpop.f32.mrb[0].mxu0
    %1164 = vmatprep.mubr.f32.mxu0 0.0
    %1165 = vmatmul.mubr.f32.gmra.mrb[0].mxu0 %v1075
    %v1166 = vpop.f32.mrb[0].mxu0
    %v1167 = vadd.f32 %v1069, %v1166
    %v1168 = vpop.f32.mrb[0].mxu0
    %1169 = vmatprep.mubr.f32.mxu0 0.0
    %1170 = vmatmul.mubr.f32.gmra.mrb[0].mxu0 %v1078
    %v1171 = vpop.f32.mrb[0].mxu0
    %v1172 = vadd.f32 %v1069, %v1171
    %v1173 = vpop.f32.mrb[0].mxu0
    %1174 = vmatprep.mubr.f32.mxu0 0.0
    %1175 = vmatmul.mubr.f32.gmra.mrb[0].mxu0 %v1081
    %v1176 = vpop.f32.mrb[0].mxu0
    %v1177 = vadd.f32 %v1069, %v1176
    %v1178 = vpop.f32.mrb[0].mxu0
    %1179 = vmatprep.mubr.f32.mxu0 0.0
    %1180 = vmatmul.mubr.f32.gmra.mrb[0].mxu0 %v1084
    %v1181 = vpop.f32.mrb[0].mxu0
    %v1182 = vadd.f32 %v1069, %v1181
    %v1183 = vpop.f32.mrb[0].mxu0
    %1184 = vmatprep.mubr.f32.mxu0 0.0
    %1185 = vmatmul.mubr.f32.gmra.mrb[0].mxu0 %v1087
    %v1186 = vpop.f32.mrb[0].mxu0
    %v1187 = vadd.f32 %v1069, %v1186
    %v1188 = vpop.f32.mrb[0].mxu0
    %1189 = vmatprep.mubr.f32.mxu0 0.0
    %1190 = vmatmul.mubr.f32.gmra.mrb[0].mxu0 %v1090
    %v1191 = vpop.f32.mrb[0].mxu0
    %v1192 = vadd.f32 %v1069, %v1191
    %v1193 = vpop.f32.mrb[0].mxu0
    %1194 = vmatprep.mubr.f32.mxu0 0.0
    %1195 = vmatmul.mubr.f32.gmra.mrb[0].mxu0 %v1093
    %v1196 = vpop.f32.mrb[0].mxu0
    %v1197 = vadd.f32 %v1069, %v1196
    %v1198 = vpop.f32.mrb[0].mxu0
    %1199 = vdwg.mxu0
    %vm1200 = vcmask 130048
    %v1201 = vsel %vm1200, %v1162, -inf
    %v1202 = vrot.slane %v1201, 4
    %v1203 = vmax.f32 %v1201, %v1202
    %v1204 = vrot.slane %v1203, 2
    %v1205 = vmax.f32 %v1203, %v1204
    %v1206 = vrot.slane %v1205, 1
    %v1207 = vmax.f32 %v1205, %v1206
    %v1208 = vsel %vm1200, %v1167, -inf
    %v1209 = vrot.slane %v1208, 4
    %v1210 = vmax.f32 %v1208, %v1209
    %v1211 = vrot.slane %v1210, 2
    %v1212 = vmax.f32 %v1210, %v1211
    %v1213 = vrot.slane %v1212, 1
    %v1214 = vmax.f32 %v1212, %v1213
    %v1215 = vsel %vm1200, %v1172, -inf
    %v1216 = vrot.slane %v1215, 4
    %v1217 = vmax.f32 %v1215, %v1216
    %v1218 = vrot.slane %v1217, 2
    %v1219 = vmax.f32 %v1217, %v1218
    %v1220 = vrot.slane %v1219, 1
    %v1221 = vmax.f32 %v1219, %v1220
    %v1222 = vsel %vm1200, %v1177, -inf
    %v1223 = vrot.slane %v1222, 4
    %v1224 = vmax.f32 %v1222, %v1223
    %v1225 = vrot.slane %v1224, 2
    %v1226 = vmax.f32 %v1224, %v1225
    %v1227 = vrot.slane %v1226, 1
    %v1228 = vmax.f32 %v1226, %v1227
    %v1229 = vsel %vm1200, %v1182, -inf
    %v1230 = vrot.slane %v1229, 4
    %v1231 = vmax.f32 %v1229, %v1230
    %v1232 = vrot.slane %v1231, 2
    %v1233 = vmax.f32 %v1231, %v1232
    %v1234 = vrot.slane %v1233, 1
    %v1235 = vmax.f32 %v1233, %v1234
    %v1236 = vsel %vm1200, %v1187, -inf
    %v1237 = vrot.slane %v1236, 4
    %v1238 = vmax.f32 %v1236, %v1237
    %v1239 = vrot.slane %v1238, 2
    %v1240 = vmax.f32 %v1238, %v1239
    %v1241 = vrot.slane %v1240, 1
    %v1242 = vmax.f32 %v1240, %v1241
    %v1243 = vsel %vm1200, %v1192, -inf
    %v1244 = vrot.slane %v1243, 4
    %v1245 = vmax.f32 %v1243, %v1244
    %v1246 = vrot.slane %v1245, 2
    %v1247 = vmax.f32 %v1245, %v1246
    %v1248 = vrot.slane %v1247, 1
    %v1249 = vmax.f32 %v1247, %v1248
    %v1250 = vsel %vm1200, %v1197, -inf
    %v1251 = vrot.slane %v1250, 4
    %v1252 = vmax.f32 %v1250, %v1251
    %v1253 = vrot.slane %v1252, 2
    %v1254 = vmax.f32 %v1252, %v1253
    %v1255 = vrot.slane %v1254, 1
    %v1256 = vmax.f32 %v1254, %v1255
    %v1257 = vsub.f32 %v1162, %v1207
    %v1258 = vsub.f32 %v1167, %v1214
    %v1259 = vsub.f32 %v1172, %v1221
    %v1260 = vsub.f32 %v1177, %v1228
    %v1261 = vsub.f32 %v1182, %v1235
    %v1262 = vsub.f32 %v1187, %v1242
    %v1263 = vsub.f32 %v1192, %v1249
    %v1264 = vsub.f32 %v1197, %v1256
    %v1265 = vmul.f32 %v1257, 1.442695
    %v1266 = vpow.pop %v1265
    %v1267 = vmul.f32 %v1258, 1.442695
    %v1268 = vpow.pop %v1267
    %v1269 = vmul.f32 %v1259, 1.442695
    %v1270 = vpow.pop %v1269
    %v1271 = vmul.f32 %v1260, 1.442695
    %v1272 = vpow.pop %v1271
    %v1273 = vmul.f32 %v1261, 1.442695
    %v1274 = vpow.pop %v1273
    %v1275 = vmul.f32 %v1262, 1.442695
    %v1276 = vpow.pop %v1275
    %v1277 = vmul.f32 %v1263, 1.442695
    %v1278 = vpow.pop %v1277
    %v1279 = vmul.f32 %v1264, 1.442695
    %v1280 = vpow.pop %v1279
    %v1281 = vsel %vm1200, %v1266, 0.0
    %v1282 = vrot.slane %v1281, 4
    %v1283 = vadd.f32 %v1281, %v1282
    %v1284 = vrot.slane %v1283, 2
    %v1285 = vadd.f32 %v1283, %v1284
    %v1286 = vrot.slane %v1285, 1
    %v1287 = vadd.f32 %v1285, %v1286
    %v1288 = vsel %vm1200, %v1268, 0.0
    %v1289 = vrot.slane %v1288, 4
    %v1290 = vadd.f32 %v1288, %v1289
    %v1291 = vrot.slane %v1290, 2
    %v1292 = vadd.f32 %v1290, %v1291
    %v1293 = vrot.slane %v1292, 1
    %v1294 = vadd.f32 %v1292, %v1293
    %v1295 = vsel %vm1200, %v1270, 0.0
    %v1296 = vrot.slane %v1295, 4
    %v1297 = vadd.f32 %v1295, %v1296
    %v1298 = vrot.slane %v1297, 2
    %v1299 = vadd.f32 %v1297, %v1298
    %v1300 = vrot.slane %v1299, 1
    %v1301 = vadd.f32 %v1299, %v1300
    %v1302 = vsel %vm1200, %v1272, 0.0
    %v1303 = vrot.slane %v1302, 4
    %v1304 = vadd.f32 %v1302, %v1303
    %v1305 = vrot.slane %v1304, 2
    %v1306 = vadd.f32 %v1304, %v1305
    %v1307 = vrot.slane %v1306, 1
    %v1308 = vadd.f32 %v1306, %v1307
    %v1309 = vsel %vm1200, %v1274, 0.0
    %v1310 = vrot.slane %v1309, 4
    %v1311 = vadd.f32 %v1309, %v1310
    %v1312 = vrot.slane %v1311, 2
    %v1313 = vadd.f32 %v1311, %v1312
    %v1314 = vrot.slane %v1313, 1
    %v1315 = vadd.f32 %v1313, %v1314
    %v1316 = vsel %vm1200, %v1276, 0.0
    %v1317 = vrot.slane %v1316, 4
    %v1318 = vadd.f32 %v1316, %v1317
    %v1319 = vrot.slane %v1318, 2
    %v1320 = vadd.f32 %v1318, %v1319
    %v1321 = vrot.slane %v1320, 1
    %v1322 = vadd.f32 %v1320, %v1321
    %v1323 = vsel %vm1200, %v1278, 0.0
    %v1324 = vrot.slane %v1323, 4
    %v1325 = vadd.f32 %v1323, %v1324
    %v1326 = vrot.slane %v1325, 2
    %v1327 = vadd.f32 %v1325, %v1326
    %v1328 = vrot.slane %v1327, 1
    %v1329 = vadd.f32 %v1327, %v1328
    %v1330 = vsel %vm1200, %v1280, 0.0
    %v1331 = vrot.slane %v1330, 4
    %v1332 = vadd.f32 %v1330, %v1331
    %v1333 = vrot.slane %v1332, 2
    %v1334 = vadd.f32 %v1332, %v1333
    %v1335 = vrot.slane %v1334, 1
    %v1336 = vadd.f32 %v1334, %v1335
    %v1337 = vlog2.pop %v1287
    %v1338 = vmul.f32 %v1337, 0.6931472
    %v1339 = vlog2.pop %v1294
    %v1340 = vmul.f32 %v1339, 0.6931472
    %v1341 = vlog2.pop %v1301
    %v1342 = vmul.f32 %v1341, 0.6931472
    %v1343 = vlog2.pop %v1308
    %v1344 = vmul.f32 %v1343, 0.6931472
    %v1345 = vlog2.pop %v1315
    %v1346 = vmul.f32 %v1345, 0.6931472
    %v1347 = vlog2.pop %v1322
    %v1348 = vmul.f32 %v1347, 0.6931472
    %v1349 = vlog2.pop %v1329
    %v1350 = vmul.f32 %v1349, 0.6931472
    %v1351 = vlog2.pop %v1336
    %v1352 = vmul.f32 %v1351, 0.6931472
    %v1353 = vadd.f32 %v1207, %v1338
    %v1354 = vadd.f32 %v1214, %v1340
    %v1355 = vadd.f32 %v1221, %v1342
    %v1356 = vadd.f32 %v1228, %v1344
    %v1357 = vadd.f32 %v1235, %v1346
    %v1358 = vadd.f32 %v1242, %v1348
    %v1359 = vadd.f32 %v1249, %v1350
    %v1360 = vadd.f32 %v1256, %v1352
    %v1361 = vsub.f32 %v1162, %v1353
    %v1362 = vsub.f32 %v1167, %v1354
    %v1363 = vsub.f32 %v1172, %v1355
    %v1364 = vsub.f32 %v1177, %v1356
    %v1365 = vsub.f32 %v1182, %v1357
    %v1366 = vsub.f32 %v1187, %v1358
    %v1367 = vsub.f32 %v1192, %v1359
    %v1368 = vsub.f32 %v1197, %v1360
    %1369 = vst.msk [vmem:[#allocation9] sm:$0xff] %vm1200, %v1361
    %1370 = vst.msk [vmem:[#allocation9 + $0x8] sm:$0xff] %vm1200, %v1362
    %1371 = vst.msk [vmem:[#allocation9 + $0x10] sm:$0xff] %vm1200, %v1363
    %1372 = vst.msk [vmem:[#allocation9 + $0x18] sm:$0xff] %vm1200, %v1364
    %1373 = vst.msk [vmem:[#allocation9 + $0x20] sm:$0xff] %vm1200, %v1365
    %1374 = vst.msk [vmem:[#allocation9 + $0x28] sm:$0xff] %vm1200, %v1366
    %1375 = vst.msk [vmem:[#allocation9 + $0x30] sm:$0xff] %vm1200, %v1367
    %1376 = vst.msk [vmem:[#allocation9 + $0x38] sm:$0xff] %vm1200, %v1368
    // Predicated region
    $region34: #{tpu_custom_call.1} parent=1 // pred_check
      _
    $region35: #{tpu_custom_call.1} parent=1 // pred_check_branch
      %1378 = sbr.rel (0) target = $region37
    $region36: #{tpu_custom_call.1} parent=1 // pred_region
      %s1380 = ssub.s32 1024, 1024
      %1381 = vsyncadd [#allocation6], %s1380
      %s1382 = sshll.u32 [#allocation9], 4
      %s1383 = int_to_ptr.vmem [resolvable:$true] %s1382
      %1388 = dma.vmem_to_hbm [thread:$0]  %s1383, 1024, %s6, [#allocation6], 128, 128, 8
    $region37: #{tpu_custom_call.1} parent=1 // pred_fallthru
      _
    // Predicated region
    $region38: #{tpu_custom_call.1} parent=1 // pred_check
      _
    $region39: #{tpu_custom_call.1} parent=1 // pred_check_branch
      %1390 = sbr.rel (0) target = $region41
    $region40: #{tpu_custom_call.1} parent=1 // pred_region
      %1391 = dma.done [#allocation6], 1024
    $region41: #{tpu_custom_call.1} parent=1 // pred_fallthru
      _
    %1392 = vsyncpa [#allocation5], 1
    %1393 = vsyncpa [#allocation8], 1
    %1394 = vsyncpa [#allocation6], 1

</llo_original>
